<compile_context>
chip_gen: v7x
topology: tpu7x:2x2x1
jax: 0.10.0
libtpu: 0.0.40
codegen_flags: <defaults>
</compile_context>

<pallas_src>
import functools

import numpy as np
import jax
import jax.numpy as jnp
from jax.experimental import pallas as pl
from jax.experimental.pallas import tpu as pltpu


def _ceil_to(v, m):
    return (v + m - 1) // m * m


def _pointconv_kernel(xp_ref, pos_ref, bcol_ref, pselt_ref, bsel_ref,
                      pselp_ref, w1t_ref, b1t_ref, w1pbd_ref, w2bd_ref,
                      exp_ref, b2t_ref, out_ref,
                      *, r2, s_max, tm, g, n, gh1, outl):
    f32 = jnp.float32
    bf16 = jnp.bfloat16
    highest = jax.lax.Precision.HIGHEST

    # ---------------- stage 1: batched, lane-dense per-tile work ------------
    # Source half of nn layer-1, tiled G times along lanes:
    #   base[:, i*H1:(i+1)*H1] = [x_j | pos_j] @ W1 + b1   for every group i.
    base = jnp.dot(xp_ref[...], w1t_ref[...],
                   preferred_element_type=f32) + b1t_ref[...]          # (N, G*H1)
    # Per-target half (pos_i @ W1p), G targets packed per row.
    piw = jnp.dot(pselp_ref[...], w1pbd_ref[...],
                  preferred_element_type=f32)                          # (TM/G, G*H1)

    # Squared distances, source-major: d2[j, i] = |pos_j - pos_i|^2.
    pos = pos_ref[...]                                                 # (N, 3)
    pj2 = jnp.sum(pos * pos, axis=1, keepdims=True)                    # (N, 1)
    pt = pselt_ref[...]                                                # (3, TM)
    pi2 = jnp.sum(pt * pt, axis=0, keepdims=True)                      # (1, TM)
    cross = jnp.dot(pos, pt, precision=highest,
                    preferred_element_type=f32)                        # (N, TM)
    d2 = pj2 + pi2 - 2.0 * cross                                       # (N, TM)
    rmask = jnp.logical_and(bcol_ref[...] == bsel_ref[...], d2 <= r2)  # (N, TM)

    # max_num_neighbors: inclusive prefix count of in-radius sources along the
    # source (sublane) axis via a log2(N)-step zero-filled shift-add scan.
    cnt = rmask.astype(f32)
    shift = 1
    while shift < n:
        cnt = cnt + jnp.concatenate(
            [jnp.zeros((shift, tm), f32), cnt[:n - shift, :]], axis=0)
        shift *= 2
    keep = jnp.logical_and(rmask, cnt <= float(s_max))

    # Bipartite self-loop (add_self_loops): source index j equals the global
    # pooled-row index of the target (same convention as the reference / PyG).
    src = jax.lax.broadcasted_iota(jnp.int32, (n, 1), 0)               # (N, 1)
    tgt = (pl.program_id(0) * tm
           + jax.lax.broadcasted_iota(jnp.int32, (1, tm), 1))          # (1, TM)
    mask = jnp.logical_or(keep, src == tgt)                            # (N, TM)
    neg = jnp.where(mask, 0.0, -1e30)                                  # (N, TM) f32

    # ---------- stage 2: packed message MLP + masked max (aggr='max') -------
    w2bd = w2bd_ref[...]                                               # (G*H1, OUTL)
    expm = exp_ref[...]                                                # (G, OUTL)
    rows = []
    for k in range(tm // g):        # static unroll; every slice below is static
        h1 = jnp.maximum(base - piw[k:k + 1, :], 0.0).astype(bf16)     # (N, G*H1)
        h2 = jnp.dot(h1, w2bd, preferred_element_type=f32)             # (N, OUTL)
        # expand this group's G mask columns onto the packed lanes with one
        # tiny matmul (runs on the otherwise idle MXU slot).
        negp = jnp.dot(neg[:, g * k:g * (k + 1)].astype(bf16), expm,
                       preferred_element_type=f32)                     # (N, OUTL)
        rows.append(jnp.max(h2 + negp, axis=0, keepdims=True))         # (1, OUTL)
    out_ref[...] = jnp.concatenate(rows, axis=0) + b2t_ref[...]        # (TM/G, OUTL)


def topk_pointnetpp(x, score, pos, batch, params, *, ratio, r, num_samples,
                    batch_size, nodes_per_graph):
    """Forward pass of TopK_PointNetPP.  Returns (x_out, pos_out, batch_out)."""
    w1x, w1p, b1, w2, b2 = params
    n, f = x.shape
    h1 = w1x.shape[1]
    h2 = w2.shape[1]

    # ---- glue: torch_geometric `topk(score, ratio, batch)` (per-graph top-k)
    k = int(np.ceil(ratio * nodes_per_graph))
    s = score.reshape(batch_size, nodes_per_graph)
    order = jnp.argsort(-s, axis=1)[:, :k]
    idx = (order + (jnp.arange(batch_size) * nodes_per_graph)[:, None]).reshape(-1)
    pos_sel = pos[idx]
    batch_sel = batch[idx]
    m = idx.shape[0]

    # ---- packing geometry: G targets share one 128-lane MXU call ----
    g = 128 // h1 if (h1 <= 128 and 128 % h1 == 0) else 1
    gh1 = g * h1
    outl = _ceil_to(max(g * h2, 128), 128)

    # ---- target-tile size (bigger TM where VMEM allows) ----
    try:
        vmem_cap = int(pltpu.get_tpu_info().vmem_capacity_bytes)
    except Exception:  # pragma: no cover - conservative fallback
        vmem_cap = 64 * 2 ** 20
    big_tm = 256 if vmem_cap >= 100 * 2 ** 20 else 128
    tm = big_tm if m >= big_tm else _ceil_to(m, max(8, g))
    mp = _ceil_to(m, tm)
    padm = mp - m

    # ---- source padding to a sublane multiple (masked out via batch = -1) ----
    npad = _ceil_to(n, 8)
    padn = npad - n
    pos_p = jnp.pad(pos, ((0, padn), (0, 0)))
    x_p = jnp.pad(x, ((0, padn), (0, 0)))
    batch_p = jnp.pad(batch.astype(jnp.int32), ((0, padn),), constant_values=-1)

    pos_sel_p = jnp.pad(pos_sel, ((0, padm), (0, 0)))
    batch_sel_p = jnp.pad(batch_sel.astype(jnp.int32), ((0, padm),),
                          constant_values=-1)

    # ---- kernel operands ----
    xp = jnp.concatenate([x_p, pos_p], axis=1).astype(jnp.bfloat16)     # (Np, F+3)
    bcol = batch_p.reshape(npad, 1)                                     # (Np, 1)
    pselt = pos_sel_p.T                                                 # (3, MP)
    bsel_row = batch_sel_p.reshape(1, mp)                               # (1, MP)
    psel_packed = pos_sel_p.reshape(mp // g, 3 * g)                     # (MP/G, 3G)

    w1 = jnp.concatenate([w1x, w1p], axis=0)                            # (F+3, H1)
    w1t = jnp.tile(w1, (1, g)).astype(jnp.bfloat16)                     # (F+3, GH1)
    b1t = jnp.tile(b1, (1, g)).astype(jnp.float32)                      # (1, GH1)
    w1pbd = jnp.kron(jnp.eye(g, dtype=jnp.float32), w1p)                # (3G, GH1)
    w2bd = jnp.pad(jnp.kron(jnp.eye(g, dtype=jnp.float32), w2),
                   ((0, 0), (0, outl - g * h2))).astype(jnp.bfloat16)   # (GH1, OUTL)
    expm = jnp.pad(jnp.kron(jnp.eye(g, dtype=jnp.float32),
                            jnp.ones((1, h2), jnp.float32)),
                   ((0, 0), (0, outl - g * h2))).astype(jnp.bfloat16)   # (G, OUTL)
    b2t = jnp.pad(jnp.tile(b2, (1, g)),
                  ((0, 0), (0, outl - g * h2))).astype(jnp.float32)     # (1, OUTL)

    # ---- explicit scoped-VMEM budget (double-buffered blocks + temporaries) --
    def _blk(rows, cols, itemsize):
        return _ceil_to(max(int(rows), 1), 8) * _ceil_to(max(int(cols), 1), 128) * itemsize

    blocks = (_blk(npad, f + 3, 2) + _blk(npad, 3, 4) + _blk(npad, 1, 4)
              + _blk(3, tm, 4) + _blk(1, tm, 4) + _blk(tm // g, 3 * g, 4)
              + _blk(f + 3, gh1, 2) + _blk(1, gh1, 4) + _blk(3 * g, gh1, 4)
              + _blk(gh1, outl, 2) + _blk(g, outl, 2) + _blk(1, outl, 4)
              + _blk(tm // g, outl, 4))
    temps = (6 * _blk(npad, tm, 4) + _blk(npad, gh1, 4)
             + 3 * _blk(npad, outl, 4))
    est = 2 * blocks + temps + (4 << 20)
    vmem_limit = int(min(max(est, 32 << 20), int(0.9 * vmem_cap)))

    kernel = functools.partial(_pointconv_kernel, r2=float(r) ** 2,
                               s_max=int(num_samples), tm=tm, g=g, n=npad,
                               gh1=gh1, outl=outl)

    out = pl.pallas_call(
        kernel,
        out_shape=jax.ShapeDtypeStruct((mp // g, outl), jnp.float32),
        grid=(mp // tm,),
        in_specs=[
            pl.BlockSpec((npad, f + 3), lambda i: (0, 0)),   # xp = [x | pos] bf16
            pl.BlockSpec((npad, 3), lambda i: (0, 0)),       # pos (f32, radius)
            pl.BlockSpec((npad, 1), lambda i: (0, 0)),       # batch (col)
            pl.BlockSpec((3, tm), lambda i: (0, i)),         # pos_sel^T tile
            pl.BlockSpec((1, tm), lambda i: (0, i)),         # batch_sel tile
            pl.BlockSpec((tm // g, 3 * g), lambda i: (i, 0)),  # pos_sel packed
            pl.BlockSpec((f + 3, gh1), lambda i: (0, 0)),    # W1 tiled (bf16)
            pl.BlockSpec((1, gh1), lambda i: (0, 0)),        # b1 tiled
            pl.BlockSpec((3 * g, gh1), lambda i: (0, 0)),    # blockdiag(W1p)
            pl.BlockSpec((gh1, outl), lambda i: (0, 0)),     # blockdiag(W2) bf16
            pl.BlockSpec((g, outl), lambda i: (0, 0)),       # mask expander bf16
            pl.BlockSpec((1, outl), lambda i: (0, 0)),       # b2 tiled
        ],
        out_specs=pl.BlockSpec((tm // g, outl), lambda i: (i, 0)),
        compiler_params=pltpu.CompilerParams(
            dimension_semantics=("parallel",),
            vmem_limit_bytes=vmem_limit),
    )(xp, pos_p, bcol, pselt, bsel_row, psel_packed,
      w1t, b1t, w1pbd, w2bd, expm, b2t)

    out = out[:, :g * h2].reshape(mp, h2)[:m]
    return out, pos_sel, batch_sel


def reference(x, score, pos, batch, params, *, ratio, r, num_samples,
              batch_size, nodes_per_graph):
    """Pure-JAX dense reference with identical semantics (for verification)."""
    w1x, w1p, b1, w2, b2 = params
    k = int(np.ceil(ratio * nodes_per_graph))
    s = score.reshape(batch_size, nodes_per_graph)
    order = jnp.argsort(-s, axis=1)[:, :k]
    idx = (order + (jnp.arange(batch_size) * nodes_per_graph)[:, None]).reshape(-1)
    pos_sel, batch_sel = pos[idx], batch[idx]
    m, n = idx.shape[0], pos.shape[0]
    highest = jax.lax.Precision.HIGHEST

    # same expanded-form distance as the kernel (consistent boundary decisions)
    pi2 = jnp.sum(pos_sel * pos_sel, axis=1, keepdims=True)             # (M, 1)
    pj2 = jnp.sum(pos * pos, axis=1)                                    # (N,)
    cross = jnp.dot(pos_sel, pos.T, precision=highest)                  # (M, N)
    d2 = pi2 + pj2[None, :] - 2.0 * cross
    rmask = (batch_sel[:, None] == batch[None, :]) & (d2 <= r * r)
    cum = jnp.cumsum(rmask.astype(jnp.int32), axis=1)
    keep = rmask & (cum <= num_samples)
    mask = keep | (jnp.arange(m)[:, None] == jnp.arange(n)[None, :])

    w1 = jnp.concatenate([w1x, w1p], axis=0)                            # (F+3, H1)
    diff = pos[None, :, :] - pos_sel[:, None, :]                        # (M, N, 3)
    msg = jnp.concatenate(
        [jnp.broadcast_to(x[None, :, :], (m, n, x.shape[1])), diff], axis=-1)
    h = jax.nn.relu(jnp.einsum('mnc,ch->mnh', msg, w1, precision=highest) + b1)
    h = jnp.einsum('mnh,ho->mno', h, w2, precision=highest) + b2
    out = jnp.max(jnp.where(mask[..., None], h, -1e30), axis=1)
    return out, pos_sel, batch_sel


if __name__ == "__main__":
    B, n_per, F, H1, H2 = 2, 16, 4, 32, 32
    N = B * n_per
    ratio, r, num_samples = 0.5, 0.5, 16

    key = jax.random.PRNGKey(0)
    kx, ks, kp, k1, k2, k3, k4 = jax.random.split(key, 7)
    x = jax.random.normal(kx, (N, F), jnp.float32)
    score = jax.random.normal(ks, (N,), jnp.float32)
    pos = jax.random.uniform(kp, (N, 3), jnp.float32)
    batch = jnp.repeat(jnp.arange(B, dtype=jnp.int32), n_per)

    # deterministic params for nn = Seq(Linear(F+3, H1), ReLU, Linear(H1, H2))
    w1 = jax.random.normal(k1, (F + 3, H1), jnp.float32) * 0.3
    b1 = jax.random.normal(k2, (1, H1), jnp.float32) * 0.1
    w2 = jax.random.normal(k3, (H1, H2), jnp.float32) * 0.3
    b2 = jax.random.normal(k4, (1, H2), jnp.float32) * 0.1
    params = (w1[:F], w1[F:], b1, w2, b2)

    out, pos_out, batch_out = topk_pointnetpp(
        x, score, pos, batch, params, ratio=ratio, r=r,
        num_samples=num_samples, batch_size=B, nodes_per_graph=n_per)
    jax.block_until_ready(out)

    ref_out, ref_pos, ref_batch = reference(
        x, score, pos, batch, params, ratio=ratio, r=r,
        num_samples=num_samples, batch_size=B, nodes_per_graph=n_per)

    np.testing.assert_allclose(np.asarray(out), np.asarray(ref_out),
                               rtol=3e-2, atol=3e-2)
    np.testing.assert_allclose(np.asarray(pos_out), np.asarray(ref_pos))
    np.testing.assert_array_equal(np.asarray(batch_out), np.asarray(ref_batch))
    print("KERNEL_OK")
</pallas_src>

<mosaic_0001>
module attributes {stable_mosaic.version = 11 : i64} {
  func.func @_pointconv_kernel(%arg0: i32, %arg1: memref<32x7xbf16, #tpu.memory_space<vmem>>, %arg2: memref<32x3xf32, #tpu.memory_space<vmem>>, %arg3: memref<32x1xi32, #tpu.memory_space<vmem>>, %arg4: memref<3x16xf32, #tpu.memory_space<vmem>>, %arg5: memref<1x16xi32, #tpu.memory_space<vmem>>, %arg6: memref<4x12xf32, #tpu.memory_space<vmem>>, %arg7: memref<7x128xbf16, #tpu.memory_space<vmem>>, %arg8: memref<1x128xf32, #tpu.memory_space<vmem>>, %arg9: memref<12x128xf32, #tpu.memory_space<vmem>>, %arg10: memref<128x128xbf16, #tpu.memory_space<vmem>>, %arg11: memref<4x128xbf16, #tpu.memory_space<vmem>>, %arg12: memref<1x128xf32, #tpu.memory_space<vmem>>, %arg13: memref<4x128xf32, #tpu.memory_space<vmem>>) attributes {dimension_semantics = [#tpu.dimension_semantics<parallel>], iteration_bounds = array<i64: 1>, scalar_prefetch = 0 : i64, scratch_operands = 0 : i64, tpu.core_type = #tpu.core_type<tc>, window_params = [{pipeline_mode = #tpu.pipeline_mode<synchronous>, transform_indices = @transform_0, window_bounds = array<i64: 32, 7>}, {pipeline_mode = #tpu.pipeline_mode<synchronous>, transform_indices = @transform_1, window_bounds = array<i64: 32, 3>}, {pipeline_mode = #tpu.pipeline_mode<synchronous>, transform_indices = @transform_2, window_bounds = array<i64: 32, 1>}, {transform_indices = @transform_3, window_bounds = array<i64: 3, 16>}, {transform_indices = @transform_4, window_bounds = array<i64: 1, 16>}, {transform_indices = @transform_5, window_bounds = array<i64: 4, 12>}, {pipeline_mode = #tpu.pipeline_mode<synchronous>, transform_indices = @transform_6, window_bounds = array<i64: 7, 128>}, {pipeline_mode = #tpu.pipeline_mode<synchronous>, transform_indices = @transform_7, window_bounds = array<i64: 1, 128>}, {pipeline_mode = #tpu.pipeline_mode<synchronous>, transform_indices = @transform_8, window_bounds = array<i64: 12, 128>}, {pipeline_mode = #tpu.pipeline_mode<synchronous>, transform_indices = @transform_9, window_bounds = array<i64: 128, 128>}, {pipeline_mode = #tpu.pipeline_mode<synchronous>, transform_indices = @transform_10, window_bounds = array<i64: 4, 128>}, {pipeline_mode = #tpu.pipeline_mode<synchronous>, transform_indices = @transform_11, window_bounds = array<i64: 1, 128>}, {transform_indices = @transform_12, window_bounds = array<i64: 4, 128>}]} {
    %c0 = arith.constant 0 : index
    %c0_0 = arith.constant 0 : index
    %0 = vector.load %arg1[%c0, %c0_0] : memref<32x7xbf16, #tpu.memory_space<vmem>>, vector<32x7xbf16>
    %c0_1 = arith.constant 0 : index
    %c0_2 = arith.constant 0 : index
    %1 = vector.load %arg7[%c0_1, %c0_2] : memref<7x128xbf16, #tpu.memory_space<vmem>>, vector<7x128xbf16>
    %cst = arith.constant dense<0.000000e+00> : vector<32x128xf32>
    %2 = tpu.matmul %0, %1, %cst {dimension_numbers = #tpu.dot_dimension_numbers<[1], [0], [0], [1], [0, 0, 1, 1], [], []>} : vector<32x7xbf16>, vector<7x128xbf16>, vector<32x128xf32> -> vector<32x128xf32>
    %c0_3 = arith.constant 0 : index
    %c0_4 = arith.constant 0 : index
    %3 = vector.load %arg8[%c0_3, %c0_4] : memref<1x128xf32, #tpu.memory_space<vmem>>, vector<1x128xf32>
    %4 = vector.broadcast %3 : vector<1x128xf32> to vector<32x128xf32>
    %5 = arith.addf %2, %4 : vector<32x128xf32>
    %c0_5 = arith.constant 0 : index
    %c0_6 = arith.constant 0 : index
    %6 = vector.load %arg6[%c0_5, %c0_6] : memref<4x12xf32, #tpu.memory_space<vmem>>, vector<4x12xf32>
    %c0_7 = arith.constant 0 : index
    %c0_8 = arith.constant 0 : index
    %7 = vector.load %arg9[%c0_7, %c0_8] : memref<12x128xf32, #tpu.memory_space<vmem>>, vector<12x128xf32>
    %cst_9 = arith.constant dense<0.000000e+00> : vector<4x128xf32>
    %8 = tpu.matmul %6, %7, %cst_9 {dimension_numbers = #tpu.dot_dimension_numbers<[1], [0], [0], [1], [0, 0, 1, 1], [], []>} : vector<4x12xf32>, vector<12x128xf32>, vector<4x128xf32> -> vector<4x128xf32>
    %c0_10 = arith.constant 0 : index
    %c0_11 = arith.constant 0 : index
    %9 = vector.load %arg2[%c0_10, %c0_11] : memref<32x3xf32, #tpu.memory_space<vmem>>, vector<32x3xf32>
    %10 = arith.mulf %9, %9 : vector<32x3xf32>
    %cst_12 = arith.constant dense<0.000000e+00> : vector<32xf32>
    %11 = vector.multi_reduction <add>, %10, %cst_12 [1] : vector<32x3xf32> to vector<32xf32>
    %12 = vector.shape_cast %11 : vector<32xf32> to vector<32x1xf32>
    %c0_13 = arith.constant 0 : index
    %c0_14 = arith.constant 0 : index
    %13 = vector.load %arg4[%c0_13, %c0_14] : memref<3x16xf32, #tpu.memory_space<vmem>>, vector<3x16xf32>
    %14 = arith.mulf %13, %13 : vector<3x16xf32>
    %cst_15 = arith.constant dense<0.000000e+00> : vector<16xf32>
    %15 = vector.multi_reduction <add>, %14, %cst_15 [0] : vector<3x16xf32> to vector<16xf32>
    %16 = vector.shape_cast %15 : vector<16xf32> to vector<1x16xf32>
    %cst_16 = arith.constant dense<0.000000e+00> : vector<32x16xf32>
    %17 = tpu.matmul %9, %13, %cst_16 {dimension_numbers = #tpu.dot_dimension_numbers<[1], [0], [0], [1], [0, 0, 1, 1], [], []>, precision = #tpu.contract_precision<fp32>} : vector<32x3xf32>, vector<3x16xf32>, vector<32x16xf32> -> vector<32x16xf32>
    %18 = vector.broadcast %12 : vector<32x1xf32> to vector<32x16xf32>
    %19 = vector.broadcast %16 : vector<1x16xf32> to vector<32x16xf32>
    %20 = arith.addf %18, %19 : vector<32x16xf32>
    %cst_17 = arith.constant 2.000000e+00 : f32
    %21 = vector.broadcast %cst_17 : f32 to vector<32x16xf32>
    %22 = arith.mulf %21, %17 : vector<32x16xf32>
    %23 = arith.subf %20, %22 : vector<32x16xf32>
    %c0_18 = arith.constant 0 : index
    %c0_19 = arith.constant 0 : index
    %24 = vector.load %arg3[%c0_18, %c0_19] : memref<32x1xi32, #tpu.memory_space<vmem>>, vector<32x1xi32>
    %c0_20 = arith.constant 0 : index
    %c0_21 = arith.constant 0 : index
    %25 = vector.load %arg5[%c0_20, %c0_21] : memref<1x16xi32, #tpu.memory_space<vmem>>, vector<1x16xi32>
    %26 = vector.broadcast %24 : vector<32x1xi32> to vector<32x16xi32>
    %27 = vector.broadcast %25 : vector<1x16xi32> to vector<32x16xi32>
    %28 = arith.cmpi eq, %26, %27 : vector<32x16xi32>
    %cst_22 = arith.constant 2.500000e-01 : f32
    %29 = vector.broadcast %cst_22 : f32 to vector<32x16xf32>
    %30 = arith.cmpf ole, %23, %29 : vector<32x16xf32>
    %31 = arith.andi %28, %30 : vector<32x16xi1>
    %32 = arith.extui %31 : vector<32x16xi1> to vector<32x16xi32>
    %33 = arith.sitofp %32 : vector<32x16xi32> to vector<32x16xf32>
    %cst_23 = arith.constant 0.000000e+00 : f32
    %34 = vector.broadcast %cst_23 : f32 to vector<1x16xf32>
    %35 = vector.extract_strided_slice %33 {offsets = [0, 0], sizes = [31, 16], strides = [1, 1]} : vector<32x16xf32> to vector<31x16xf32>
    %36 = tpu.concatenate %34, %35 in 0 : vector<1x16xf32>, vector<31x16xf32> -> vector<32x16xf32>
    %37 = arith.addf %33, %36 : vector<32x16xf32>
    %cst_24 = arith.constant 0.000000e+00 : f32
    %38 = vector.broadcast %cst_24 : f32 to vector<2x16xf32>
    %39 = vector.extract_strided_slice %37 {offsets = [0, 0], sizes = [30, 16], strides = [1, 1]} : vector<32x16xf32> to vector<30x16xf32>
    %40 = tpu.concatenate %38, %39 in 0 : vector<2x16xf32>, vector<30x16xf32> -> vector<32x16xf32>
    %41 = arith.addf %37, %40 : vector<32x16xf32>
    %cst_25 = arith.constant 0.000000e+00 : f32
    %42 = vector.broadcast %cst_25 : f32 to vector<4x16xf32>
    %43 = vector.extract_strided_slice %41 {offsets = [0, 0], sizes = [28, 16], strides = [1, 1]} : vector<32x16xf32> to vector<28x16xf32>
    %44 = tpu.concatenate %42, %43 in 0 : vector<4x16xf32>, vector<28x16xf32> -> vector<32x16xf32>
    %45 = arith.addf %41, %44 : vector<32x16xf32>
    %cst_26 = arith.constant 0.000000e+00 : f32
    %46 = vector.broadcast %cst_26 : f32 to vector<8x16xf32>
    %47 = vector.extract_strided_slice %45 {offsets = [0, 0], sizes = [24, 16], strides = [1, 1]} : vector<32x16xf32> to vector<24x16xf32>
    %48 = tpu.concatenate %46, %47 in 0 : vector<8x16xf32>, vector<24x16xf32> -> vector<32x16xf32>
    %49 = arith.addf %45, %48 : vector<32x16xf32>
    %cst_27 = arith.constant 0.000000e+00 : f32
    %50 = vector.broadcast %cst_27 : f32 to vector<16x16xf32>
    %51 = vector.extract_strided_slice %49 {offsets = [0, 0], sizes = [16, 16], strides = [1, 1]} : vector<32x16xf32> to vector<16x16xf32>
    %52 = tpu.concatenate %50, %51 in 0 : vector<16x16xf32>, vector<16x16xf32> -> vector<32x16xf32>
    %53 = arith.addf %49, %52 : vector<32x16xf32>
    %cst_28 = arith.constant 1.600000e+01 : f32
    %54 = vector.broadcast %cst_28 : f32 to vector<32x16xf32>
    %55 = arith.cmpf ole, %53, %54 : vector<32x16xf32>
    %56 = arith.andi %31, %55 : vector<32x16xi1>
    %57 = tpu.iota {dimensions = array<i32: 0>} : vector<32x1xi32>
    %c16_i32 = arith.constant 16 : i32
    %58 = arith.muli %arg0, %c16_i32 : i32
    %59 = tpu.iota {dimensions = array<i32: 1>} : vector<1x16xi32>
    %60 = vector.broadcast %58 : i32 to vector<1x16xi32>
    %61 = arith.addi %60, %59 : vector<1x16xi32>
    %62 = vector.broadcast %57 : vector<32x1xi32> to vector<32x16xi32>
    %63 = vector.broadcast %61 : vector<1x16xi32> to vector<32x16xi32>
    %64 = arith.cmpi eq, %62, %63 : vector<32x16xi32>
    %65 = arith.ori %56, %64 : vector<32x16xi1>
    %cst_29 = arith.constant 0.000000e+00 : f32
    %cst_30 = arith.constant -1.000000e+30 : f32
    %66 = vector.broadcast %cst_29 : f32 to vector<32x16xf32>
    %67 = vector.broadcast %cst_30 : f32 to vector<32x16xf32>
    %68 = arith.select %65, %66, %67 : vector<32x16xi1>, vector<32x16xf32>
    %c0_31 = arith.constant 0 : index
    %c0_32 = arith.constant 0 : index
    %69 = vector.load %arg10[%c0_31, %c0_32] : memref<128x128xbf16, #tpu.memory_space<vmem>>, vector<128x128xbf16>
    %c0_33 = arith.constant 0 : index
    %c0_34 = arith.constant 0 : index
    %70 = vector.load %arg11[%c0_33, %c0_34] : memref<4x128xbf16, #tpu.memory_space<vmem>>, vector<4x128xbf16>
    %71 = vector.extract_strided_slice %8 {offsets = [0, 0], sizes = [1, 128], strides = [1, 1]} : vector<4x128xf32> to vector<1x128xf32>
    %72 = vector.broadcast %71 : vector<1x128xf32> to vector<32x128xf32>
    %73 = arith.subf %5, %72 : vector<32x128xf32>
    %cst_35 = arith.constant 0.000000e+00 : f32
    %74 = vector.broadcast %cst_35 : f32 to vector<32x128xf32>
    %75 = arith.maximumf %73, %74 : vector<32x128xf32>
    %76 = arith.truncf %75 : vector<32x128xf32> to vector<32x128xbf16>
    %cst_36 = arith.constant dense<0.000000e+00> : vector<32x128xf32>
    %77 = tpu.matmul %76, %69, %cst_36 {dimension_numbers = #tpu.dot_dimension_numbers<[1], [0], [0], [1], [0, 0, 1, 1], [], []>} : vector<32x128xbf16>, vector<128x128xbf16>, vector<32x128xf32> -> vector<32x128xf32>
    %78 = vector.extract_strided_slice %68 {offsets = [0, 0], sizes = [32, 4], strides = [1, 1]} : vector<32x16xf32> to vector<32x4xf32>
    %79 = arith.truncf %78 : vector<32x4xf32> to vector<32x4xbf16>
    %cst_37 = arith.constant dense<0.000000e+00> : vector<32x128xf32>
    %80 = tpu.matmul %79, %70, %cst_37 {dimension_numbers = #tpu.dot_dimension_numbers<[1], [0], [0], [1], [0, 0, 1, 1], [], []>} : vector<32x4xbf16>, vector<4x128xbf16>, vector<32x128xf32> -> vector<32x128xf32>
    %81 = arith.addf %77, %80 : vector<32x128xf32>
    %cst_38 = arith.constant dense<0xFF800000> : vector<128xf32>
    %82 = vector.multi_reduction <maximumf>, %81, %cst_38 [0] : vector<32x128xf32> to vector<128xf32>
    %83 = vector.shape_cast %82 : vector<128xf32> to vector<1x128xf32>
    %84 = vector.extract_strided_slice %8 {offsets = [1, 0], sizes = [1, 128], strides = [1, 1]} : vector<4x128xf32> to vector<1x128xf32>
    %85 = vector.broadcast %84 : vector<1x128xf32> to vector<32x128xf32>
    %86 = arith.subf %5, %85 : vector<32x128xf32>
    %cst_39 = arith.constant 0.000000e+00 : f32
    %87 = vector.broadcast %cst_39 : f32 to vector<32x128xf32>
    %88 = arith.maximumf %86, %87 : vector<32x128xf32>
    %89 = arith.truncf %88 : vector<32x128xf32> to vector<32x128xbf16>
    %cst_40 = arith.constant dense<0.000000e+00> : vector<32x128xf32>
    %90 = tpu.matmul %89, %69, %cst_40 {dimension_numbers = #tpu.dot_dimension_numbers<[1], [0], [0], [1], [0, 0, 1, 1], [], []>} : vector<32x128xbf16>, vector<128x128xbf16>, vector<32x128xf32> -> vector<32x128xf32>
    %91 = vector.extract_strided_slice %68 {offsets = [0, 4], sizes = [32, 4], strides = [1, 1]} : vector<32x16xf32> to vector<32x4xf32>
    %92 = arith.truncf %91 : vector<32x4xf32> to vector<32x4xbf16>
    %cst_41 = arith.constant dense<0.000000e+00> : vector<32x128xf32>
    %93 = tpu.matmul %92, %70, %cst_41 {dimension_numbers = #tpu.dot_dimension_numbers<[1], [0], [0], [1], [0, 0, 1, 1], [], []>} : vector<32x4xbf16>, vector<4x128xbf16>, vector<32x128xf32> -> vector<32x128xf32>
    %94 = arith.addf %90, %93 : vector<32x128xf32>
    %cst_42 = arith.constant dense<0xFF800000> : vector<128xf32>
    %95 = vector.multi_reduction <maximumf>, %94, %cst_42 [0] : vector<32x128xf32> to vector<128xf32>
    %96 = vector.shape_cast %95 : vector<128xf32> to vector<1x128xf32>
    %97 = vector.extract_strided_slice %8 {offsets = [2, 0], sizes = [1, 128], strides = [1, 1]} : vector<4x128xf32> to vector<1x128xf32>
    %98 = vector.broadcast %97 : vector<1x128xf32> to vector<32x128xf32>
    %99 = arith.subf %5, %98 : vector<32x128xf32>
    %cst_43 = arith.constant 0.000000e+00 : f32
    %100 = vector.broadcast %cst_43 : f32 to vector<32x128xf32>
    %101 = arith.maximumf %99, %100 : vector<32x128xf32>
    %102 = arith.truncf %101 : vector<32x128xf32> to vector<32x128xbf16>
    %cst_44 = arith.constant dense<0.000000e+00> : vector<32x128xf32>
    %103 = tpu.matmul %102, %69, %cst_44 {dimension_numbers = #tpu.dot_dimension_numbers<[1], [0], [0], [1], [0, 0, 1, 1], [], []>} : vector<32x128xbf16>, vector<128x128xbf16>, vector<32x128xf32> -> vector<32x128xf32>
    %104 = vector.extract_strided_slice %68 {offsets = [0, 8], sizes = [32, 4], strides = [1, 1]} : vector<32x16xf32> to vector<32x4xf32>
    %105 = arith.truncf %104 : vector<32x4xf32> to vector<32x4xbf16>
    %cst_45 = arith.constant dense<0.000000e+00> : vector<32x128xf32>
    %106 = tpu.matmul %105, %70, %cst_45 {dimension_numbers = #tpu.dot_dimension_numbers<[1], [0], [0], [1], [0, 0, 1, 1], [], []>} : vector<32x4xbf16>, vector<4x128xbf16>, vector<32x128xf32> -> vector<32x128xf32>
    %107 = arith.addf %103, %106 : vector<32x128xf32>
    %cst_46 = arith.constant dense<0xFF800000> : vector<128xf32>
    %108 = vector.multi_reduction <maximumf>, %107, %cst_46 [0] : vector<32x128xf32> to vector<128xf32>
    %109 = vector.shape_cast %108 : vector<128xf32> to vector<1x128xf32>
    %110 = vector.extract_strided_slice %8 {offsets = [3, 0], sizes = [1, 128], strides = [1, 1]} : vector<4x128xf32> to vector<1x128xf32>
    %111 = vector.broadcast %110 : vector<1x128xf32> to vector<32x128xf32>
    %112 = arith.subf %5, %111 : vector<32x128xf32>
    %cst_47 = arith.constant 0.000000e+00 : f32
    %113 = vector.broadcast %cst_47 : f32 to vector<32x128xf32>
    %114 = arith.maximumf %112, %113 : vector<32x128xf32>
    %115 = arith.truncf %114 : vector<32x128xf32> to vector<32x128xbf16>
    %cst_48 = arith.constant dense<0.000000e+00> : vector<32x128xf32>
    %116 = tpu.matmul %115, %69, %cst_48 {dimension_numbers = #tpu.dot_dimension_numbers<[1], [0], [0], [1], [0, 0, 1, 1], [], []>} : vector<32x128xbf16>, vector<128x128xbf16>, vector<32x128xf32> -> vector<32x128xf32>
    %117 = vector.extract_strided_slice %68 {offsets = [0, 12], sizes = [32, 4], strides = [1, 1]} : vector<32x16xf32> to vector<32x4xf32>
    %118 = arith.truncf %117 : vector<32x4xf32> to vector<32x4xbf16>
    %cst_49 = arith.constant dense<0.000000e+00> : vector<32x128xf32>
    %119 = tpu.matmul %118, %70, %cst_49 {dimension_numbers = #tpu.dot_dimension_numbers<[1], [0], [0], [1], [0, 0, 1, 1], [], []>} : vector<32x4xbf16>, vector<4x128xbf16>, vector<32x128xf32> -> vector<32x128xf32>
    %120 = arith.addf %116, %119 : vector<32x128xf32>
    %cst_50 = arith.constant dense<0xFF800000> : vector<128xf32>
    %121 = vector.multi_reduction <maximumf>, %120, %cst_50 [0] : vector<32x128xf32> to vector<128xf32>
    %122 = vector.shape_cast %121 : vector<128xf32> to vector<1x128xf32>
    %123 = tpu.concatenate %83, %96, %109, %122 in 0 : vector<1x128xf32>, vector<1x128xf32>, vector<1x128xf32>, vector<1x128xf32> -> vector<4x128xf32>
    %c0_51 = arith.constant 0 : index
    %c0_52 = arith.constant 0 : index
    %124 = vector.load %arg12[%c0_51, %c0_52] : memref<1x128xf32, #tpu.memory_space<vmem>>, vector<1x128xf32>
    %125 = vector.broadcast %124 : vector<1x128xf32> to vector<4x128xf32>
    %126 = arith.addf %123, %125 : vector<4x128xf32>
    %c0_53 = arith.constant 0 : index
    %c0_54 = arith.constant 0 : index
    %127 = vector.load %arg13[%c0_53, %c0_54] : memref<4x128xf32, #tpu.memory_space<vmem>>, vector<4x128xf32>
    tpu.vector_store %arg13[%c0_53, %c0_54], %126 {strides = array<i32>} : memref<4x128xf32, #tpu.memory_space<vmem>>, vector<4x128xf32>,
    return
  }
  func.func @transform_0(%arg0: i32) -> (i32, i32) {
    %c0_i32 = arith.constant 0 : i32
    %c0_i32_0 = arith.constant 0 : i32
    %c0_i32_1 = arith.constant 0 : i32
    return %c0_i32, %c0_i32_0 : i32, i32
  }
  func.func @transform_1(%arg0: i32) -> (i32, i32) {
    %c0_i32 = arith.constant 0 : i32
    %c0_i32_0 = arith.constant 0 : i32
    %c0_i32_1 = arith.constant 0 : i32
    return %c0_i32, %c0_i32_0 : i32, i32
  }
  func.func @transform_2(%arg0: i32) -> (i32, i32) {
    %c0_i32 = arith.constant 0 : i32
    %c0_i32_0 = arith.constant 0 : i32
    %c0_i32_1 = arith.constant 0 : i32
    return %c0_i32, %c0_i32_0 : i32, i32
  }
  func.func @transform_3(%arg0: i32) -> (i32, i32) {
    %c0_i32 = arith.constant 0 : i32
    %c0_i32_0 = arith.constant 0 : i32
    return %c0_i32, %arg0 : i32, i32
  }
  func.func @transform_4(%arg0: i32) -> (i32, i32) {
    %c0_i32 = arith.constant 0 : i32
    %c0_i32_0 = arith.constant 0 : i32
    return %c0_i32, %arg0 : i32, i32
  }
  func.func @transform_5(%arg0: i32) -> (i32, i32) {
    %c0_i32 = arith.constant 0 : i32
    %c0_i32_0 = arith.constant 0 : i32
    return %arg0, %c0_i32 : i32, i32
  }
  func.func @transform_6(%arg0: i32) -> (i32, i32) {
    %c0_i32 = arith.constant 0 : i32
    %c0_i32_0 = arith.constant 0 : i32
    %c0_i32_1 = arith.constant 0 : i32
    return %c0_i32, %c0_i32_0 : i32, i32
  }
  func.func @transform_7(%arg0: i32) -> (i32, i32) {
    %c0_i32 = arith.constant 0 : i32
    %c0_i32_0 = arith.constant 0 : i32
    %c0_i32_1 = arith.constant 0 : i32
    return %c0_i32, %c0_i32_0 : i32, i32
  }
  func.func @transform_8(%arg0: i32) -> (i32, i32) {
    %c0_i32 = arith.constant 0 : i32
    %c0_i32_0 = arith.constant 0 : i32
    %c0_i32_1 = arith.constant 0 : i32
    return %c0_i32, %c0_i32_0 : i32, i32
  }
  func.func @transform_9(%arg0: i32) -> (i32, i32) {
    %c0_i32 = arith.constant 0 : i32
    %c0_i32_0 = arith.constant 0 : i32
    %c0_i32_1 = arith.constant 0 : i32
    return %c0_i32, %c0_i32_0 : i32, i32
  }
  func.func @transform_10(%arg0: i32) -> (i32, i32) {
    %c0_i32 = arith.constant 0 : i32
    %c0_i32_0 = arith.constant 0 : i32
    %c0_i32_1 = arith.constant 0 : i32
    return %c0_i32, %c0_i32_0 : i32, i32
  }
  func.func @transform_11(%arg0: i32) -> (i32, i32) {
    %c0_i32 = arith.constant 0 : i32
    %c0_i32_0 = arith.constant 0 : i32
    %c0_i32_1 = arith.constant 0 : i32
    return %c0_i32, %c0_i32_0 : i32, i32
  }
  func.func @transform_12(%arg0: i32) -> (i32, i32) {
    %c0_i32 = arith.constant 0 : i32
    %c0_i32_0 = arith.constant 0 : i32
    return %arg0, %c0_i32 : i32, i32
  }
}

</mosaic_0001>

<llo_original>
// kernel: tpu_custom_call.1
$region0: #{tpu_custom_call.1}
  #allocation0 [shape = 'u32[]', space=smem, size = 0x4, offset = 0x4, fixed_abs, tag = 'smem constant byte address 0x4 - core index']
  #allocation1 [shape = 'u32[144,128]{1,0:T(1,128)}', space=vmem, size = 0x12000, scoped, tag = 'internal scratch']
  %s0 = inlined_call_operand.vmem [shape: bf16[32,7], index: 0, kind: input, shape index: {}]
  %s1 = inlined_call_operand.vmem [shape: f32[32,3], index: 1, kind: input, shape index: {}]
  %s2 = inlined_call_operand.vmem [shape: s32[32,1], index: 2, kind: input, shape index: {}]
  %s3 = inlined_call_operand.vmem [shape: f32[3,16], index: 3, kind: input, shape index: {}]
  %s4 = inlined_call_operand.vmem [shape: s32[1,16], index: 4, kind: input, shape index: {}]
  %s5 = inlined_call_operand.vmem [shape: f32[4,12], index: 5, kind: input, shape index: {}]
  %s6 = inlined_call_operand.vmem [shape: bf16[7,128], index: 6, kind: input, shape index: {}]
  %s7 = inlined_call_operand.vmem [shape: f32[1,128], index: 7, kind: input, shape index: {}]
  %s8 = inlined_call_operand.vmem [shape: f32[12,128], index: 8, kind: input, shape index: {}]
  %s9 = inlined_call_operand.vmem [shape: bf16[128,128], index: 9, kind: input, shape index: {}]
  %s10 = inlined_call_operand.vmem [shape: bf16[4,128], index: 10, kind: input, shape index: {}]
  %s11 = inlined_call_operand.vmem [shape: f32[1,128], index: 11, kind: input, shape index: {}]
  %s12 = inlined_call_operand.hbm [shape: f32[4,128], index: 12, kind: output, shape index: {}]
  %s13 = sld [smem:[#allocation0]]
  $region58: #{tpu_custom_call.1} parent=0
    _
  %s15 = ssub.s32 1, %s13
  %s16 = scalar_select 0, %s15, %s13
  $region1: #{tpu_custom_call.1} parent=0
    #allocation2 [shape = 'u8[2048]{0}', space=vmem, size = 0x800, scoped, tag = 'output window, operand 0, single buffered']
    #allocation3 [shape = 's32[1]{0}', space=sflag, size = 0x4, scoped, tag = 'scoped memory for tpu_custom_call.1']
    %17 = vsyncpa [#allocation3], 0
    // Predicated region
    $region2: #{tpu_custom_call.1} parent=1 // pred_check
      _
    $region3: #{tpu_custom_call.1} parent=1 // pred_check_branch
      %19 = sbr.rel (0) target = $region5
    $region4: #{tpu_custom_call.1} parent=1 // pred_region
      _
    $region5: #{tpu_custom_call.1} parent=1 // pred_fallthru
      _
    // Predicated region
    $region6: #{tpu_custom_call.1} parent=1 // pred_check
      _
    $region7: #{tpu_custom_call.1} parent=1 // pred_check_branch
      %21 = sbr.rel (0) target = $region9
    $region8: #{tpu_custom_call.1} parent=1 // pred_region
      _
    $region9: #{tpu_custom_call.1} parent=1 // pred_fallthru
      _
    // Predicated region
    $region10: #{tpu_custom_call.1} parent=1 // pred_check
      _
    $region11: #{tpu_custom_call.1} parent=1 // pred_check_branch
      %23 = sbr.rel (0) target = $region13
    $region12: #{tpu_custom_call.1} parent=1 // pred_region
      _
    $region13: #{tpu_custom_call.1} parent=1 // pred_fallthru
      _
    // Predicated region
    $region14: #{tpu_custom_call.1} parent=1 // pred_check
      _
    $region15: #{tpu_custom_call.1} parent=1 // pred_check_branch
      %25 = sbr.rel (0) target = $region17
    $region16: #{tpu_custom_call.1} parent=1 // pred_region
      _
    $region17: #{tpu_custom_call.1} parent=1 // pred_fallthru
      _
    // Predicated region
    $region18: #{tpu_custom_call.1} parent=1 // pred_check
      _
    $region19: #{tpu_custom_call.1} parent=1 // pred_check_branch
      %27 = sbr.rel (0) target = $region21
    $region20: #{tpu_custom_call.1} parent=1 // pred_region
      _
    $region21: #{tpu_custom_call.1} parent=1 // pred_fallthru
      _
    // Predicated region
    $region22: #{tpu_custom_call.1} parent=1 // pred_check
      _
    $region23: #{tpu_custom_call.1} parent=1 // pred_check_branch
      %29 = sbr.rel (0) target = $region25
    $region24: #{tpu_custom_call.1} parent=1 // pred_region
      _
    $region25: #{tpu_custom_call.1} parent=1 // pred_fallthru
      _
    // Predicated region
    $region26: #{tpu_custom_call.1} parent=1 // pred_check
      _
    $region27: #{tpu_custom_call.1} parent=1 // pred_check_branch
      %31 = sbr.rel (0) target = $region29
    $region28: #{tpu_custom_call.1} parent=1 // pred_region
      _
    $region29: #{tpu_custom_call.1} parent=1 // pred_fallthru
      _
    // Predicated region
    $region30: #{tpu_custom_call.1} parent=1 // pred_check
      _
    $region31: #{tpu_custom_call.1} parent=1 // pred_check_branch
      %33 = sbr.rel (0) target = $region33
    $region32: #{tpu_custom_call.1} parent=1 // pred_region
      _
    $region33: #{tpu_custom_call.1} parent=1 // pred_fallthru
      _
    // Predicated region
    $region34: #{tpu_custom_call.1} parent=1 // pred_check
      _
    $region35: #{tpu_custom_call.1} parent=1 // pred_check_branch
      %35 = sbr.rel (0) target = $region37
    $region36: #{tpu_custom_call.1} parent=1 // pred_region
      _
    $region37: #{tpu_custom_call.1} parent=1 // pred_fallthru
      _
    // Predicated region
    $region38: #{tpu_custom_call.1} parent=1 // pred_check
      _
    $region39: #{tpu_custom_call.1} parent=1 // pred_check_branch
      %37 = sbr.rel (0) target = $region41
    $region40: #{tpu_custom_call.1} parent=1 // pred_region
      _
    $region41: #{tpu_custom_call.1} parent=1 // pred_fallthru
      _
    // Predicated region
    $region42: #{tpu_custom_call.1} parent=1 // pred_check
      _
    $region43: #{tpu_custom_call.1} parent=1 // pred_check_branch
      %39 = sbr.rel (0) target = $region45
    $region44: #{tpu_custom_call.1} parent=1 // pred_region
      _
    $region45: #{tpu_custom_call.1} parent=1 // pred_fallthru
      _
    // Predicated region
    $region46: #{tpu_custom_call.1} parent=1 // pred_check
      _
    $region47: #{tpu_custom_call.1} parent=1 // pred_check_branch
      %41 = sbr.rel (0) target = $region49
    $region48: #{tpu_custom_call.1} parent=1 // pred_region
      _
    $region49: #{tpu_custom_call.1} parent=1 // pred_fallthru
      _
    %v43 = vld [vmem:[%s0] sm:$0xf]
    %v44 = vld [vmem:[%s0 + $0x4] sm:$0xf]
    %v45 = vld [vmem:[%s0 + $0x8] sm:$0xf]
    %v46 = vld [vmem:[%s0 + $0xc] sm:$0xf]
    %v47 = vld [vmem:[%s6] sm:$0xf]
    %v48 = vld [vmem:[%s7] sm:$0x1]
    %v50 = vlaneseq
    %v51 = vshrl.u32 %v50, 7
    %v52 = vsub.s32 0, %v51
    %v53 = vrot.slane %v48, %v52
    %v59 = vunpack.c.l.b16 %v43
    %v60 = vunpack.c.l.b16 %v44
    %v61 = vunpack.c.l.b16 %v45
    %v62 = vunpack.c.l.b16 %v46
    %v63 = vpack.c.b16 %v60, %v59
    %v64 = vpack.c.b16 %v62, %v61
    %vm65 = vcmask 56320
    %v67 = vsel %vm65, %v63, 0
    %v70 = vsel %vm65, %v64, 0
    %vm72 = vcmask 1042432
    %vm73 = vcmask 1043456
    %v74 = vsel %vm72, 4294967295, 65535
    %v75 = vsel %vm73, %v74, 0
    %v77 = vand.u32 %v47, %v75
    %79 = vmatprep.subr.bf16.mxu0 0
    %80 = vmatpush1.bf16.msra.mxu0 %v77
    %81 = vmatprep.subr.bf16.mxu0 0
    %82 = vmatpush1.bf16.msra.mxu0 0
    %83 = vmatprep.subr.bf16.mxu0 0
    %84 = vmatpush1.bf16.msra.mxu0 0
    %85 = vmatprep.subr.bf16.mxu0 0
    %86 = vmatpush1.bf16.msra.mxu0 0
    %87 = vmatprep.subr.bf16.mxu0 0
    %88 = vmatpush1.bf16.msra.mxu0 0
    %89 = vmatprep.subr.bf16.mxu0 0
    %90 = vmatpush1.bf16.msra.mxu0 0
    %91 = vmatprep.subr.bf16.mxu0 0
    %92 = vmatpush1.bf16.msra.mxu0 0
    %93 = vmatprep.subr.bf16.mxu0 0
    %94 = vmatpush1.bf16.msra.mxu0 0
    %95 = vmatprep.subr.bf16.mxu0 0
    %96 = vmatpush1.bf16.msra.mxu0 0
    %97 = vmatprep.subr.bf16.mxu0 0
    %98 = vmatpush1.bf16.msra.mxu0 0
    %99 = vmatprep.subr.bf16.mxu0 0
    %100 = vmatpush1.bf16.msra.mxu0 0
    %101 = vmatprep.subr.bf16.mxu0 0
    %102 = vmatpush1.bf16.msra.mxu0 0
    %103 = vmatprep.subr.bf16.mxu0 0
    %104 = vmatpush1.bf16.msra.mxu0 0
    %105 = vmatprep.subr.bf16.mxu0 0
    %106 = vmatpush1.bf16.msra.mxu0 0
    %107 = vmatprep.subr.bf16.mxu0 0
    %108 = vmatpush1.bf16.msra.mxu0 0
    %109 = vmatprep.subr.bf16.mxu0 0
    %110 = vmatpush1.bf16.msra.mxu0 0
    %111 = vmatprep.mubr.bf16.mxu0 0
    %112 = vmatmul.mubr.bf16.gmra.mrb[0].mxu0 %v67
    %v113 = vpop.f32.mrb[0].mxu0
    %v114 = vadd.f32 %v53, %v113
    %v115 = vpop.f32.mrb[0].mxu0
    %v116 = vpop.f32.mrb[0].mxu0
    %v117 = vadd.f32 %v53, %v116
    %v118 = vpop.f32.mrb[0].mxu0
    %119 = vmatprep.mubr.bf16.mxu0 0
    %120 = vmatmul.mubr.bf16.gmra.mrb[0].mxu0 %v70
    %v121 = vpop.f32.mrb[0].mxu0
    %v122 = vadd.f32 %v53, %v121
    %v123 = vpop.f32.mrb[0].mxu0
    %v124 = vpop.f32.mrb[0].mxu0
    %v125 = vadd.f32 %v53, %v124
    %v126 = vpop.f32.mrb[0].mxu0
    %127 = vdwg.mxu0
    %v128 = vld [vmem:[%s5] sm:$0xf]
    %v129 = vld [vmem:[%s8] sm:$0xff]
    %v130 = vld [vmem:[%s8 + $0x8] sm:$0xf]
    %vm131 = vcmask 97280
    %v133 = vsel %vm131, %v128, 0
    %v136 = vsel %vm73, %v130, 0
    %138 = vmatprep.subr.mxu0 0.0
    %139 = vmatpush1.msra.mxu0 %v129
    %140 = vmatprep.subr.mxu0 0.0
    %141 = vmatpush1.msra.mxu0 %v136
    %142 = vmatprep.subr.mxu0 0.0
    %143 = vmatpush1.msra.mxu0 0.0
    %144 = vmatprep.subr.mxu0 0.0
    %145 = vmatpush1.msra.mxu0 0.0
    %146 = vmatprep.subr.mxu0 0.0
    %147 = vmatpush1.msra.mxu0 0.0
    %148 = vmatprep.subr.mxu0 0.0
    %149 = vmatpush1.msra.mxu0 0.0
    %150 = vmatprep.subr.mxu0 0.0
    %151 = vmatpush1.msra.mxu0 0.0
    %152 = vmatprep.subr.mxu0 0.0
    %153 = vmatpush1.msra.mxu0 0.0
    %154 = vmatprep.subr.mxu0 0.0
    %155 = vmatpush1.msra.mxu0 0.0
    %156 = vmatprep.subr.mxu0 0.0
    %157 = vmatpush1.msra.mxu0 0.0
    %158 = vmatprep.subr.mxu0 0.0
    %159 = vmatpush1.msra.mxu0 0.0
    %160 = vmatprep.subr.mxu0 0.0
    %161 = vmatpush1.msra.mxu0 0.0
    %162 = vmatprep.subr.mxu0 0.0
    %163 = vmatpush1.msra.mxu0 0.0
    %164 = vmatprep.subr.mxu0 0.0
    %165 = vmatpush1.msra.mxu0 0.0
    %166 = vmatprep.subr.mxu0 0.0
    %167 = vmatpush1.msra.mxu0 0.0
    %168 = vmatprep.subr.mxu0 0.0
    %169 = vmatpush1.msra.mxu0 0.0
    %170 = vmatprep.subr.mxu0 0.0
    %171 = vmatpush1.msra.mxu0 0.0
    %172 = vmatprep.subr.mxu0 0.0
    %173 = vmatpush1.msra.mxu0 0.0
    %174 = vmatprep.subr.mxu0 0.0
    %175 = vmatpush1.msra.mxu0 0.0
    %176 = vmatprep.subr.mxu0 0.0
    %177 = vmatpush1.msra.mxu0 0.0
    %178 = vmatprep.subr.mxu0 0.0
    %179 = vmatpush1.msra.mxu0 0.0
    %180 = vmatprep.subr.mxu0 0.0
    %181 = vmatpush1.msra.mxu0 0.0
    %182 = vmatprep.subr.mxu0 0.0
    %183 = vmatpush1.msra.mxu0 0.0
    %184 = vmatprep.subr.mxu0 0.0
    %185 = vmatpush1.msra.mxu0 0.0
    %186 = vmatprep.subr.mxu0 0.0
    %187 = vmatpush1.msra.mxu0 0.0
    %188 = vmatprep.subr.mxu0 0.0
    %189 = vmatpush1.msra.mxu0 0.0
    %190 = vmatprep.subr.mxu0 0.0
    %191 = vmatpush1.msra.mxu0 0.0
    %192 = vmatprep.subr.mxu0 0.0
    %193 = vmatpush1.msra.mxu0 0.0
    %194 = vmatprep.subr.mxu0 0.0
    %195 = vmatpush1.msra.mxu0 0.0
    %196 = vmatprep.subr.mxu0 0.0
    %197 = vmatpush1.msra.mxu0 0.0
    %198 = vmatprep.subr.mxu0 0.0
    %199 = vmatpush1.msra.mxu0 0.0
    %200 = vmatprep.subr.mxu0 0.0
    %201 = vmatpush1.msra.mxu0 0.0
    %202 = vmatprep.mubr.f32.mxu0 0.0
    %203 = vmatmul.mubr.f32.gmra.mrb[0].mxu0 %v133
    %v204 = vpop.f32.mrb[0].mxu0
    %v205 = vadd.f32 0.0, %v204
    %v206 = vpop.f32.mrb[0].mxu0
    %207 = vdwg.mxu0
    %v208 = vld [vmem:[%s1] sm:$0xff]
    %v209 = vld [vmem:[%s1 + $0x8] sm:$0xff]
    %v210 = vld [vmem:[%s1 + $0x10] sm:$0xff]
    %v211 = vld [vmem:[%s1 + $0x18] sm:$0xff]
    %v212 = vmul.f32 %v208, %v208
    %v213 = vmul.f32 %v209, %v209
    %v214 = vmul.f32 %v210, %v210
    %v215 = vmul.f32 %v211, %v211
    %vm216 = vcmask 23552
    %v217 = vsel %vm216, %v212, 0.0
    %218 = vadd.xlane.f32.xlu0 %v217
    %v219 = vpop.xlane.xlu0 %218
    %v220 = vsel %vm216, %v213, 0.0
    %221 = vadd.xlane.f32.xlu0 %v220
    %v222 = vpop.xlane.xlu0 %221
    %v223 = vsel %vm216, %v214, 0.0
    %224 = vadd.xlane.f32.xlu0 %v223
    %v225 = vpop.xlane.xlu0 %224
    %v226 = vsel %vm216, %v215, 0.0
    %227 = vadd.xlane.f32.xlu0 %v226
    %v228 = vpop.xlane.xlu0 %227
    %v229 = vld [vmem:[%s3] sm:$0x7]
    %v230 = vmul.f32 %v229, %v229
    %vm231 = vcmask 124928
    %v232 = vsel %vm231, %v230, 0.0
    %v233 = vrot.slane %v232, 4
    %v234 = vadd.f32 %v232, %v233
    %v235 = vrot.slane %v234, 2
    %v236 = vadd.f32 %v234, %v235
    %v237 = vrot.slane %v236, 1
    %v238 = vadd.f32 %v236, %v237
    %v240 = vsel %vm216, %v208, 0
    %v243 = vsel %vm216, %v209, 0
    %v246 = vsel %vm216, %v210, 0
    %v249 = vsel %vm216, %v211, 0
    %v252 = vsel %vm72, %v229, 0
    %254 = vmatprep.subr.mxu0 0.0
    %v255 = vand.u32 %v252, 4294901760
    %256 = vmatpush1.msra.mxu0 %v255
    %257 = vmatprep.subr.mxu0 0.0
    %258 = vmatpush1.msra.mxu0 0.0
    %259 = vmatprep.subr.mxu0 0.0
    %260 = vmatpush1.msra.mxu0 0.0
    %261 = vmatprep.subr.mxu0 0.0
    %262 = vmatpush1.msra.mxu0 0.0
    %263 = vmatprep.subr.mxu0 0.0
    %264 = vmatpush1.msra.mxu0 0.0
    %265 = vmatprep.subr.mxu0 0.0
    %266 = vmatpush1.msra.mxu0 0.0
    %267 = vmatprep.subr.mxu0 0.0
    %268 = vmatpush1.msra.mxu0 0.0
    %269 = vmatprep.subr.mxu0 0.0
    %270 = vmatpush1.msra.mxu0 0.0
    %271 = vmatprep.subr.mxu0 0.0
    %272 = vmatpush1.msra.mxu0 0.0
    %273 = vmatprep.subr.mxu0 0.0
    %274 = vmatpush1.msra.mxu0 0.0
    %275 = vmatprep.subr.mxu0 0.0
    %276 = vmatpush1.msra.mxu0 0.0
    %277 = vmatprep.subr.mxu0 0.0
    %278 = vmatpush1.msra.mxu0 0.0
    %279 = vmatprep.subr.mxu0 0.0
    %280 = vmatpush1.msra.mxu0 0.0
    %281 = vmatprep.subr.mxu0 0.0
    %282 = vmatpush1.msra.mxu0 0.0
    %283 = vmatprep.subr.mxu0 0.0
    %284 = vmatpush1.msra.mxu0 0.0
    %285 = vmatprep.subr.mxu0 0.0
    %286 = vmatpush1.msra.mxu0 0.0
    %287 = vmatprep.subr.mxu0 0.0
    %288 = vmatpush1.msra.mxu0 0.0
    %289 = vmatprep.subr.mxu0 0.0
    %290 = vmatpush1.msra.mxu0 0.0
    %291 = vmatprep.subr.mxu0 0.0
    %292 = vmatpush1.msra.mxu0 0.0
    %293 = vmatprep.subr.mxu0 0.0
    %294 = vmatpush1.msra.mxu0 0.0
    %295 = vmatprep.subr.mxu0 0.0
    %296 = vmatpush1.msra.mxu0 0.0
    %297 = vmatprep.subr.mxu0 0.0
    %298 = vmatpush1.msra.mxu0 0.0
    %299 = vmatprep.subr.mxu0 0.0
    %300 = vmatpush1.msra.mxu0 0.0
    %301 = vmatprep.subr.mxu0 0.0
    %302 = vmatpush1.msra.mxu0 0.0
    %303 = vmatprep.subr.mxu0 0.0
    %304 = vmatpush1.msra.mxu0 0.0
    %305 = vmatprep.subr.mxu0 0.0
    %306 = vmatpush1.msra.mxu0 0.0
    %307 = vmatprep.subr.mxu0 0.0
    %308 = vmatpush1.msra.mxu0 0.0
    %309 = vmatprep.subr.mxu0 0.0
    %310 = vmatpush1.msra.mxu0 0.0
    %311 = vmatprep.subr.mxu0 0.0
    %312 = vmatpush1.msra.mxu0 0.0
    %313 = vmatprep.subr.mxu0 0.0
    %314 = vmatpush1.msra.mxu0 0.0
    %315 = vmatprep.subr.mxu0 0.0
    %316 = vmatpush1.msra.mxu0 0.0
    %317 = vmatprep.subr.mxu0 0.0
    %318 = vmatpush1.msra.mxu0 0.0
    %319 = vmatprep.mubr.f32.mxu0 0.0
    %v320 = vand.u32 %v240, 4294901760
    %v321 = vsub.f32 %v240, %v320
    %v322 = vand.u32 %v321, 4294901760
    %v323 = vsub.f32 %v321, %v322
    %v324 = vand.u32 %v323, 4294901760
    %325 = vmatmul.mubr.f32.gmra.mrb[0].mxu0 %v324
    %v326 = vpop.f32.mrb[0].mxu0
    %v327 = vadd.f32 0.0, %v326
    %v328 = vpop.f32.mrb[0].mxu0
    %329 = vmatprep.mubr.f32.mxu0 0.0
    %v330 = vand.u32 %v243, 4294901760
    %v331 = vsub.f32 %v243, %v330
    %v332 = vand.u32 %v331, 4294901760
    %v333 = vsub.f32 %v331, %v332
    %v334 = vand.u32 %v333, 4294901760
    %335 = vmatmul.mubr.f32.gmra.mrb[0].mxu0 %v334
    %v336 = vpop.f32.mrb[0].mxu0
    %v337 = vadd.f32 0.0, %v336
    %v338 = vpop.f32.mrb[0].mxu0
    %339 = vmatprep.mubr.f32.mxu0 0.0
    %v340 = vand.u32 %v246, 4294901760
    %v341 = vsub.f32 %v246, %v340
    %v342 = vand.u32 %v341, 4294901760
    %v343 = vsub.f32 %v341, %v342
    %v344 = vand.u32 %v343, 4294901760
    %345 = vmatmul.mubr.f32.gmra.mrb[0].mxu0 %v344
    %v346 = vpop.f32.mrb[0].mxu0
    %v347 = vadd.f32 0.0, %v346
    %v348 = vpop.f32.mrb[0].mxu0
    %349 = vmatprep.mubr.f32.mxu0 0.0
    %v350 = vand.u32 %v249, 4294901760
    %v351 = vsub.f32 %v249, %v350
    %v352 = vand.u32 %v351, 4294901760
    %v353 = vsub.f32 %v351, %v352
    %v354 = vand.u32 %v353, 4294901760
    %355 = vmatmul.mubr.f32.gmra.mrb[0].mxu0 %v354
    %v356 = vpop.f32.mrb[0].mxu0
    %v357 = vadd.f32 0.0, %v356
    %v358 = vpop.f32.mrb[0].mxu0
    %359 = vdwg.mxu0
    %360 = vmatprep.subr.mxu0 0.0
    %v361 = vand.u32 %v252, 4294901760
    %v362 = vsub.f32 %v252, %v361
    %v363 = vand.u32 %v362, 4294901760
    %v364 = vsub.f32 %v362, %v363
    %v365 = vand.u32 %v364, 4294901760
    %366 = vmatpush1.msra.mxu0 %v365
    %367 = vmatprep.subr.mxu0 0.0
    %368 = vmatpush1.msra.mxu0 0.0
    %369 = vmatprep.subr.mxu0 0.0
    %370 = vmatpush1.msra.mxu0 0.0
    %371 = vmatprep.subr.mxu0 0.0
    %372 = vmatpush1.msra.mxu0 0.0
    %373 = vmatprep.subr.mxu0 0.0
    %374 = vmatpush1.msra.mxu0 0.0
    %375 = vmatprep.subr.mxu0 0.0
    %376 = vmatpush1.msra.mxu0 0.0
    %377 = vmatprep.subr.mxu0 0.0
    %378 = vmatpush1.msra.mxu0 0.0
    %379 = vmatprep.subr.mxu0 0.0
    %380 = vmatpush1.msra.mxu0 0.0
    %381 = vmatprep.subr.mxu0 0.0
    %382 = vmatpush1.msra.mxu0 0.0
    %383 = vmatprep.subr.mxu0 0.0
    %384 = vmatpush1.msra.mxu0 0.0
    %385 = vmatprep.subr.mxu0 0.0
    %386 = vmatpush1.msra.mxu0 0.0
    %387 = vmatprep.subr.mxu0 0.0
    %388 = vmatpush1.msra.mxu0 0.0
    %389 = vmatprep.subr.mxu0 0.0
    %390 = vmatpush1.msra.mxu0 0.0
    %391 = vmatprep.subr.mxu0 0.0
    %392 = vmatpush1.msra.mxu0 0.0
    %393 = vmatprep.subr.mxu0 0.0
    %394 = vmatpush1.msra.mxu0 0.0
    %395 = vmatprep.subr.mxu0 0.0
    %396 = vmatpush1.msra.mxu0 0.0
    %397 = vmatprep.subr.mxu0 0.0
    %398 = vmatpush1.msra.mxu0 0.0
    %399 = vmatprep.subr.mxu0 0.0
    %400 = vmatpush1.msra.mxu0 0.0
    %401 = vmatprep.subr.mxu0 0.0
    %402 = vmatpush1.msra.mxu0 0.0
    %403 = vmatprep.subr.mxu0 0.0
    %404 = vmatpush1.msra.mxu0 0.0
    %405 = vmatprep.subr.mxu0 0.0
    %406 = vmatpush1.msra.mxu0 0.0
    %407 = vmatprep.subr.mxu0 0.0
    %408 = vmatpush1.msra.mxu0 0.0
    %409 = vmatprep.subr.mxu0 0.0
    %410 = vmatpush1.msra.mxu0 0.0
    %411 = vmatprep.subr.mxu0 0.0
    %412 = vmatpush1.msra.mxu0 0.0
    %413 = vmatprep.subr.mxu0 0.0
    %414 = vmatpush1.msra.mxu0 0.0
    %415 = vmatprep.subr.mxu0 0.0
    %416 = vmatpush1.msra.mxu0 0.0
    %417 = vmatprep.subr.mxu0 0.0
    %418 = vmatpush1.msra.mxu0 0.0
    %419 = vmatprep.subr.mxu0 0.0
    %420 = vmatpush1.msra.mxu0 0.0
    %421 = vmatprep.subr.mxu0 0.0
    %422 = vmatpush1.msra.mxu0 0.0
    %423 = vmatprep.subr.mxu0 0.0
    %424 = vmatpush1.msra.mxu0 0.0
    %425 = vmatprep.subr.mxu0 0.0
    %426 = vmatpush1.msra.mxu0 0.0
    %427 = vmatprep.subr.mxu0 0.0
    %428 = vmatpush1.msra.mxu0 0.0
    %429 = vmatprep.mubr.f32.mxu0 0.0
    %v430 = vand.u32 %v240, 4294901760
    %431 = vmatmul.mubr.f32.gmra.mrb[0].mxu0 %v430
    %v432 = vpop.f32.mrb[0].mxu0
    %v433 = vadd.f32 %v327, %v432
    %v434 = vpop.f32.mrb[0].mxu0
    %435 = vmatprep.mubr.f32.mxu0 0.0
    %v436 = vand.u32 %v243, 4294901760
    %437 = vmatmul.mubr.f32.gmra.mrb[0].mxu0 %v436
    %v438 = vpop.f32.mrb[0].mxu0
    %v439 = vadd.f32 %v337, %v438
    %v440 = vpop.f32.mrb[0].mxu0
    %441 = vmatprep.mubr.f32.mxu0 0.0
    %v442 = vand.u32 %v246, 4294901760
    %443 = vmatmul.mubr.f32.gmra.mrb[0].mxu0 %v442
    %v444 = vpop.f32.mrb[0].mxu0
    %v445 = vadd.f32 %v347, %v444
    %v446 = vpop.f32.mrb[0].mxu0
    %447 = vmatprep.mubr.f32.mxu0 0.0
    %v448 = vand.u32 %v249, 4294901760
    %449 = vmatmul.mubr.f32.gmra.mrb[0].mxu0 %v448
    %v450 = vpop.f32.mrb[0].mxu0
    %v451 = vadd.f32 %v357, %v450
    %v452 = vpop.f32.mrb[0].mxu0
    %453 = vdwg.mxu0
    %454 = vmatprep.subr.mxu0 0.0
    %v455 = vand.u32 %v252, 4294901760
    %v456 = vsub.f32 %v252, %v455
    %457 = vmatpush1.msra.mxu0 %v456
    %458 = vmatprep.subr.mxu0 0.0
    %459 = vmatpush1.msra.mxu0 0.0
    %460 = vmatprep.subr.mxu0 0.0
    %461 = vmatpush1.msra.mxu0 0.0
    %462 = vmatprep.subr.mxu0 0.0
    %463 = vmatpush1.msra.mxu0 0.0
    %464 = vmatprep.subr.mxu0 0.0
    %465 = vmatpush1.msra.mxu0 0.0
    %466 = vmatprep.subr.mxu0 0.0
    %467 = vmatpush1.msra.mxu0 0.0
    %468 = vmatprep.subr.mxu0 0.0
    %469 = vmatpush1.msra.mxu0 0.0
    %470 = vmatprep.subr.mxu0 0.0
    %471 = vmatpush1.msra.mxu0 0.0
    %472 = vmatprep.subr.mxu0 0.0
    %473 = vmatpush1.msra.mxu0 0.0
    %474 = vmatprep.subr.mxu0 0.0
    %475 = vmatpush1.msra.mxu0 0.0
    %476 = vmatprep.subr.mxu0 0.0
    %477 = vmatpush1.msra.mxu0 0.0
    %478 = vmatprep.subr.mxu0 0.0
    %479 = vmatpush1.msra.mxu0 0.0
    %480 = vmatprep.subr.mxu0 0.0
    %481 = vmatpush1.msra.mxu0 0.0
    %482 = vmatprep.subr.mxu0 0.0
    %483 = vmatpush1.msra.mxu0 0.0
    %484 = vmatprep.subr.mxu0 0.0
    %485 = vmatpush1.msra.mxu0 0.0
    %486 = vmatprep.subr.mxu0 0.0
    %487 = vmatpush1.msra.mxu0 0.0
    %488 = vmatprep.subr.mxu0 0.0
    %489 = vmatpush1.msra.mxu0 0.0
    %490 = vmatprep.subr.mxu0 0.0
    %491 = vmatpush1.msra.mxu0 0.0
    %492 = vmatprep.subr.mxu0 0.0
    %493 = vmatpush1.msra.mxu0 0.0
    %494 = vmatprep.subr.mxu0 0.0
    %495 = vmatpush1.msra.mxu0 0.0
    %496 = vmatprep.subr.mxu0 0.0
    %497 = vmatpush1.msra.mxu0 0.0
    %498 = vmatprep.subr.mxu0 0.0
    %499 = vmatpush1.msra.mxu0 0.0
    %500 = vmatprep.subr.mxu0 0.0
    %501 = vmatpush1.msra.mxu0 0.0
    %502 = vmatprep.subr.mxu0 0.0
    %503 = vmatpush1.msra.mxu0 0.0
    %504 = vmatprep.subr.mxu0 0.0
    %505 = vmatpush1.msra.mxu0 0.0
    %506 = vmatprep.subr.mxu0 0.0
    %507 = vmatpush1.msra.mxu0 0.0
    %508 = vmatprep.subr.mxu0 0.0
    %509 = vmatpush1.msra.mxu0 0.0
    %510 = vmatprep.subr.mxu0 0.0
    %511 = vmatpush1.msra.mxu0 0.0
    %512 = vmatprep.subr.mxu0 0.0
    %513 = vmatpush1.msra.mxu0 0.0
    %514 = vmatprep.subr.mxu0 0.0
    %515 = vmatpush1.msra.mxu0 0.0
    %516 = vmatprep.subr.mxu0 0.0
    %517 = vmatpush1.msra.mxu0 0.0
    %518 = vmatprep.subr.mxu0 0.0
    %519 = vmatpush1.msra.mxu0 0.0
    %520 = vmatprep.mubr.f32.mxu0 0.0
    %v521 = vand.u32 %v240, 4294901760
    %v522 = vsub.f32 %v240, %v521
    %523 = vmatmul.mubr.f32.gmra.mrb[0].mxu0 %v522
    %v524 = vpop.f32.mrb[0].mxu0
    %v525 = vadd.f32 %v433, %v524
    %v526 = vpop.f32.mrb[0].mxu0
    %527 = vmatprep.mubr.f32.mxu0 0.0
    %v528 = vand.u32 %v243, 4294901760
    %v529 = vsub.f32 %v243, %v528
    %530 = vmatmul.mubr.f32.gmra.mrb[0].mxu0 %v529
    %v531 = vpop.f32.mrb[0].mxu0
    %v532 = vadd.f32 %v439, %v531
    %v533 = vpop.f32.mrb[0].mxu0
    %534 = vmatprep.mubr.f32.mxu0 0.0
    %v535 = vand.u32 %v246, 4294901760
    %v536 = vsub.f32 %v246, %v535
    %537 = vmatmul.mubr.f32.gmra.mrb[0].mxu0 %v536
    %v538 = vpop.f32.mrb[0].mxu0
    %v539 = vadd.f32 %v445, %v538
    %v540 = vpop.f32.mrb[0].mxu0
    %541 = vmatprep.mubr.f32.mxu0 0.0
    %v542 = vand.u32 %v249, 4294901760
    %v543 = vsub.f32 %v249, %v542
    %544 = vmatmul.mubr.f32.gmra.mrb[0].mxu0 %v543
    %v545 = vpop.f32.mrb[0].mxu0
    %v546 = vadd.f32 %v451, %v545
    %v547 = vpop.f32.mrb[0].mxu0
    %548 = vdwg.mxu0
    %549 = vmatprep.subr.mxu0 0.0
    %v550 = vand.u32 %v252, 4294901760
    %551 = vmatpush1.msra.mxu0 %v550
    %552 = vmatprep.subr.mxu0 0.0
    %553 = vmatpush1.msra.mxu0 0.0
    %554 = vmatprep.subr.mxu0 0.0
    %555 = vmatpush1.msra.mxu0 0.0
    %556 = vmatprep.subr.mxu0 0.0
    %557 = vmatpush1.msra.mxu0 0.0
    %558 = vmatprep.subr.mxu0 0.0
    %559 = vmatpush1.msra.mxu0 0.0
    %560 = vmatprep.subr.mxu0 0.0
    %561 = vmatpush1.msra.mxu0 0.0
    %562 = vmatprep.subr.mxu0 0.0
    %563 = vmatpush1.msra.mxu0 0.0
    %564 = vmatprep.subr.mxu0 0.0
    %565 = vmatpush1.msra.mxu0 0.0
    %566 = vmatprep.subr.mxu0 0.0
    %567 = vmatpush1.msra.mxu0 0.0
    %568 = vmatprep.subr.mxu0 0.0
    %569 = vmatpush1.msra.mxu0 0.0
    %570 = vmatprep.subr.mxu0 0.0
    %571 = vmatpush1.msra.mxu0 0.0
    %572 = vmatprep.subr.mxu0 0.0
    %573 = vmatpush1.msra.mxu0 0.0
    %574 = vmatprep.subr.mxu0 0.0
    %575 = vmatpush1.msra.mxu0 0.0
    %576 = vmatprep.subr.mxu0 0.0
    %577 = vmatpush1.msra.mxu0 0.0
    %578 = vmatprep.subr.mxu0 0.0
    %579 = vmatpush1.msra.mxu0 0.0
    %580 = vmatprep.subr.mxu0 0.0
    %581 = vmatpush1.msra.mxu0 0.0
    %582 = vmatprep.subr.mxu0 0.0
    %583 = vmatpush1.msra.mxu0 0.0
    %584 = vmatprep.subr.mxu0 0.0
    %585 = vmatpush1.msra.mxu0 0.0
    %586 = vmatprep.subr.mxu0 0.0
    %587 = vmatpush1.msra.mxu0 0.0
    %588 = vmatprep.subr.mxu0 0.0
    %589 = vmatpush1.msra.mxu0 0.0
    %590 = vmatprep.subr.mxu0 0.0
    %591 = vmatpush1.msra.mxu0 0.0
    %592 = vmatprep.subr.mxu0 0.0
    %593 = vmatpush1.msra.mxu0 0.0
    %594 = vmatprep.subr.mxu0 0.0
    %595 = vmatpush1.msra.mxu0 0.0
    %596 = vmatprep.subr.mxu0 0.0
    %597 = vmatpush1.msra.mxu0 0.0
    %598 = vmatprep.subr.mxu0 0.0
    %599 = vmatpush1.msra.mxu0 0.0
    %600 = vmatprep.subr.mxu0 0.0
    %601 = vmatpush1.msra.mxu0 0.0
    %602 = vmatprep.subr.mxu0 0.0
    %603 = vmatpush1.msra.mxu0 0.0
    %604 = vmatprep.subr.mxu0 0.0
    %605 = vmatpush1.msra.mxu0 0.0
    %606 = vmatprep.subr.mxu0 0.0
    %607 = vmatpush1.msra.mxu0 0.0
    %608 = vmatprep.subr.mxu0 0.0
    %609 = vmatpush1.msra.mxu0 0.0
    %610 = vmatprep.subr.mxu0 0.0
    %611 = vmatpush1.msra.mxu0 0.0
    %612 = vmatprep.subr.mxu0 0.0
    %613 = vmatpush1.msra.mxu0 0.0
    %614 = vmatprep.mubr.f32.mxu0 0.0
    %v615 = vand.u32 %v240, 4294901760
    %v616 = vsub.f32 %v240, %v615
    %v617 = vand.u32 %v616, 4294901760
    %618 = vmatmul.mubr.f32.gmra.mrb[0].mxu0 %v617
    %v619 = vpop.f32.mrb[0].mxu0
    %v620 = vadd.f32 %v525, %v619
    %v621 = vpop.f32.mrb[0].mxu0
    %622 = vmatprep.mubr.f32.mxu0 0.0
    %v623 = vand.u32 %v243, 4294901760
    %v624 = vsub.f32 %v243, %v623
    %v625 = vand.u32 %v624, 4294901760
    %626 = vmatmul.mubr.f32.gmra.mrb[0].mxu0 %v625
    %v627 = vpop.f32.mrb[0].mxu0
    %v628 = vadd.f32 %v532, %v627
    %v629 = vpop.f32.mrb[0].mxu0
    %630 = vmatprep.mubr.f32.mxu0 0.0
    %v631 = vand.u32 %v246, 4294901760
    %v632 = vsub.f32 %v246, %v631
    %v633 = vand.u32 %v632, 4294901760
    %634 = vmatmul.mubr.f32.gmra.mrb[0].mxu0 %v633
    %v635 = vpop.f32.mrb[0].mxu0
    %v636 = vadd.f32 %v539, %v635
    %v637 = vpop.f32.mrb[0].mxu0
    %638 = vmatprep.mubr.f32.mxu0 0.0
    %v639 = vand.u32 %v249, 4294901760
    %v640 = vsub.f32 %v249, %v639
    %v641 = vand.u32 %v640, 4294901760
    %642 = vmatmul.mubr.f32.gmra.mrb[0].mxu0 %v641
    %v643 = vpop.f32.mrb[0].mxu0
    %v644 = vadd.f32 %v546, %v643
    %v645 = vpop.f32.mrb[0].mxu0
    %646 = vdwg.mxu0
    %647 = vmatprep.subr.mxu0 0.0
    %v648 = vand.u32 %v252, 4294901760
    %v649 = vsub.f32 %v252, %v648
    %v650 = vand.u32 %v649, 4294901760
    %651 = vmatpush1.msra.mxu0 %v650
    %652 = vmatprep.subr.mxu0 0.0
    %653 = vmatpush1.msra.mxu0 0.0
    %654 = vmatprep.subr.mxu0 0.0
    %655 = vmatpush1.msra.mxu0 0.0
    %656 = vmatprep.subr.mxu0 0.0
    %657 = vmatpush1.msra.mxu0 0.0
    %658 = vmatprep.subr.mxu0 0.0
    %659 = vmatpush1.msra.mxu0 0.0
    %660 = vmatprep.subr.mxu0 0.0
    %661 = vmatpush1.msra.mxu0 0.0
    %662 = vmatprep.subr.mxu0 0.0
    %663 = vmatpush1.msra.mxu0 0.0
    %664 = vmatprep.subr.mxu0 0.0
    %665 = vmatpush1.msra.mxu0 0.0
    %666 = vmatprep.subr.mxu0 0.0
    %667 = vmatpush1.msra.mxu0 0.0
    %668 = vmatprep.subr.mxu0 0.0
    %669 = vmatpush1.msra.mxu0 0.0
    %670 = vmatprep.subr.mxu0 0.0
    %671 = vmatpush1.msra.mxu0 0.0
    %672 = vmatprep.subr.mxu0 0.0
    %673 = vmatpush1.msra.mxu0 0.0
    %674 = vmatprep.subr.mxu0 0.0
    %675 = vmatpush1.msra.mxu0 0.0
    %676 = vmatprep.subr.mxu0 0.0
    %677 = vmatpush1.msra.mxu0 0.0
    %678 = vmatprep.subr.mxu0 0.0
    %679 = vmatpush1.msra.mxu0 0.0
    %680 = vmatprep.subr.mxu0 0.0
    %681 = vmatpush1.msra.mxu0 0.0
    %682 = vmatprep.subr.mxu0 0.0
    %683 = vmatpush1.msra.mxu0 0.0
    %684 = vmatprep.subr.mxu0 0.0
    %685 = vmatpush1.msra.mxu0 0.0
    %686 = vmatprep.subr.mxu0 0.0
    %687 = vmatpush1.msra.mxu0 0.0
    %688 = vmatprep.subr.mxu0 0.0
    %689 = vmatpush1.msra.mxu0 0.0
    %690 = vmatprep.subr.mxu0 0.0
    %691 = vmatpush1.msra.mxu0 0.0
    %692 = vmatprep.subr.mxu0 0.0
    %693 = vmatpush1.msra.mxu0 0.0
    %694 = vmatprep.subr.mxu0 0.0
    %695 = vmatpush1.msra.mxu0 0.0
    %696 = vmatprep.subr.mxu0 0.0
    %697 = vmatpush1.msra.mxu0 0.0
    %698 = vmatprep.subr.mxu0 0.0
    %699 = vmatpush1.msra.mxu0 0.0
    %700 = vmatprep.subr.mxu0 0.0
    %701 = vmatpush1.msra.mxu0 0.0
    %702 = vmatprep.subr.mxu0 0.0
    %703 = vmatpush1.msra.mxu0 0.0
    %704 = vmatprep.subr.mxu0 0.0
    %705 = vmatpush1.msra.mxu0 0.0
    %706 = vmatprep.subr.mxu0 0.0
    %707 = vmatpush1.msra.mxu0 0.0
    %708 = vmatprep.subr.mxu0 0.0
    %709 = vmatpush1.msra.mxu0 0.0
    %710 = vmatprep.subr.mxu0 0.0
    %711 = vmatpush1.msra.mxu0 0.0
    %712 = vmatprep.subr.mxu0 0.0
    %713 = vmatpush1.msra.mxu0 0.0
    %714 = vmatprep.mubr.f32.mxu0 0.0
    %v715 = vand.u32 %v240, 4294901760
    %716 = vmatmul.mubr.f32.gmra.mrb[0].mxu0 %v715
    %v717 = vpop.f32.mrb[0].mxu0
    %v718 = vadd.f32 %v620, %v717
    %v719 = vpop.f32.mrb[0].mxu0
    %720 = vmatprep.mubr.f32.mxu0 0.0
    %v721 = vand.u32 %v243, 4294901760
    %722 = vmatmul.mubr.f32.gmra.mrb[0].mxu0 %v721
    %v723 = vpop.f32.mrb[0].mxu0
    %v724 = vadd.f32 %v628, %v723
    %v725 = vpop.f32.mrb[0].mxu0
    %726 = vmatprep.mubr.f32.mxu0 0.0
    %v727 = vand.u32 %v246, 4294901760
    %728 = vmatmul.mubr.f32.gmra.mrb[0].mxu0 %v727
    %v729 = vpop.f32.mrb[0].mxu0
    %v730 = vadd.f32 %v636, %v729
    %v731 = vpop.f32.mrb[0].mxu0
    %732 = vmatprep.mubr.f32.mxu0 0.0
    %v733 = vand.u32 %v249, 4294901760
    %734 = vmatmul.mubr.f32.gmra.mrb[0].mxu0 %v733
    %v735 = vpop.f32.mrb[0].mxu0
    %v736 = vadd.f32 %v644, %v735
    %v737 = vpop.f32.mrb[0].mxu0
    %738 = vdwg.mxu0
    %739 = vmatprep.subr.mxu0 0.0
    %v740 = vand.u32 %v252, 4294901760
    %741 = vmatpush1.msra.mxu0 %v740
    %742 = vmatprep.subr.mxu0 0.0
    %743 = vmatpush1.msra.mxu0 0.0
    %744 = vmatprep.subr.mxu0 0.0
    %745 = vmatpush1.msra.mxu0 0.0
    %746 = vmatprep.subr.mxu0 0.0
    %747 = vmatpush1.msra.mxu0 0.0
    %748 = vmatprep.subr.mxu0 0.0
    %749 = vmatpush1.msra.mxu0 0.0
    %750 = vmatprep.subr.mxu0 0.0
    %751 = vmatpush1.msra.mxu0 0.0
    %752 = vmatprep.subr.mxu0 0.0
    %753 = vmatpush1.msra.mxu0 0.0
    %754 = vmatprep.subr.mxu0 0.0
    %755 = vmatpush1.msra.mxu0 0.0
    %756 = vmatprep.subr.mxu0 0.0
    %757 = vmatpush1.msra.mxu0 0.0
    %758 = vmatprep.subr.mxu0 0.0
    %759 = vmatpush1.msra.mxu0 0.0
    %760 = vmatprep.subr.mxu0 0.0
    %761 = vmatpush1.msra.mxu0 0.0
    %762 = vmatprep.subr.mxu0 0.0
    %763 = vmatpush1.msra.mxu0 0.0
    %764 = vmatprep.subr.mxu0 0.0
    %765 = vmatpush1.msra.mxu0 0.0
    %766 = vmatprep.subr.mxu0 0.0
    %767 = vmatpush1.msra.mxu0 0.0
    %768 = vmatprep.subr.mxu0 0.0
    %769 = vmatpush1.msra.mxu0 0.0
    %770 = vmatprep.subr.mxu0 0.0
    %771 = vmatpush1.msra.mxu0 0.0
    %772 = vmatprep.subr.mxu0 0.0
    %773 = vmatpush1.msra.mxu0 0.0
    %774 = vmatprep.subr.mxu0 0.0
    %775 = vmatpush1.msra.mxu0 0.0
    %776 = vmatprep.subr.mxu0 0.0
    %777 = vmatpush1.msra.mxu0 0.0
    %778 = vmatprep.subr.mxu0 0.0
    %779 = vmatpush1.msra.mxu0 0.0
    %780 = vmatprep.subr.mxu0 0.0
    %781 = vmatpush1.msra.mxu0 0.0
    %782 = vmatprep.subr.mxu0 0.0
    %783 = vmatpush1.msra.mxu0 0.0
    %784 = vmatprep.subr.mxu0 0.0
    %785 = vmatpush1.msra.mxu0 0.0
    %786 = vmatprep.subr.mxu0 0.0
    %787 = vmatpush1.msra.mxu0 0.0
    %788 = vmatprep.subr.mxu0 0.0
    %789 = vmatpush1.msra.mxu0 0.0
    %790 = vmatprep.subr.mxu0 0.0
    %791 = vmatpush1.msra.mxu0 0.0
    %792 = vmatprep.subr.mxu0 0.0
    %793 = vmatpush1.msra.mxu0 0.0
    %794 = vmatprep.subr.mxu0 0.0
    %795 = vmatpush1.msra.mxu0 0.0
    %796 = vmatprep.subr.mxu0 0.0
    %797 = vmatpush1.msra.mxu0 0.0
    %798 = vmatprep.subr.mxu0 0.0
    %799 = vmatpush1.msra.mxu0 0.0
    %800 = vmatprep.subr.mxu0 0.0
    %801 = vmatpush1.msra.mxu0 0.0
    %802 = vmatprep.subr.mxu0 0.0
    %803 = vmatpush1.msra.mxu0 0.0
    %804 = vmatprep.mubr.f32.mxu0 0.0
    %v805 = vand.u32 %v240, 4294901760
    %806 = vmatmul.mubr.f32.gmra.mrb[0].mxu0 %v805
    %v807 = vpop.f32.mrb[0].mxu0
    %v808 = vadd.f32 %v718, %v807
    %v809 = vpop.f32.mrb[0].mxu0
    %810 = vmatprep.mubr.f32.mxu0 0.0
    %v811 = vand.u32 %v243, 4294901760
    %812 = vmatmul.mubr.f32.gmra.mrb[0].mxu0 %v811
    %v813 = vpop.f32.mrb[0].mxu0
    %v814 = vadd.f32 %v724, %v813
    %v815 = vpop.f32.mrb[0].mxu0
    %816 = vmatprep.mubr.f32.mxu0 0.0
    %v817 = vand.u32 %v246, 4294901760
    %818 = vmatmul.mubr.f32.gmra.mrb[0].mxu0 %v817
    %v819 = vpop.f32.mrb[0].mxu0
    %v820 = vadd.f32 %v730, %v819
    %v821 = vpop.f32.mrb[0].mxu0
    %822 = vmatprep.mubr.f32.mxu0 0.0
    %v823 = vand.u32 %v249, 4294901760
    %824 = vmatmul.mubr.f32.gmra.mrb[0].mxu0 %v823
    %v825 = vpop.f32.mrb[0].mxu0
    %v826 = vadd.f32 %v736, %v825
    %v827 = vpop.f32.mrb[0].mxu0
    %828 = vdwg.mxu0
    %v829 = vadd.f32 %v219, %v238
    %v830 = vadd.f32 %v222, %v238
    %v831 = vadd.f32 %v225, %v238
    %v832 = vadd.f32 %v228, %v238
    %v833 = vmul.f32 %v808, 2.0
    %v834 = vmul.f32 %v814, 2.0
    %v835 = vmul.f32 %v820, 2.0
    %v836 = vmul.f32 %v826, 2.0
    %v837 = vsub.f32 %v829, %v833
    %v838 = vsub.f32 %v830, %v834
    %v839 = vsub.f32 %v831, %v835
    %v840 = vsub.f32 %v832, %v836
    %v841 = vld [vmem:[%s2] sm:$0xff]
    %v842 = vld [vmem:[%s2 + $0x8] sm:$0xff]
    %v843 = vld [vmem:[%s2 + $0x10] sm:$0xff]
    %v844 = vld [vmem:[%s2 + $0x18] sm:$0xff]
    %v845 = vld [vmem:[%s4] sm:$0x1]
    %846 = vset.pattern.permute.xlu0 0
    %847 = vperm.xlu0 %846, %v841
    %v848 = vpop.permute.xlu0 %847
    %849 = vset.pattern.permute.xlu0 0
    %850 = vperm.xlu0 %849, %v842
    %v851 = vpop.permute.xlu0 %850
    %852 = vset.pattern.permute.xlu0 0
    %853 = vperm.xlu0 %852, %v843
    %v854 = vpop.permute.xlu0 %853
    %855 = vset.pattern.permute.xlu0 0
    %856 = vperm.xlu0 %855, %v844
    %v857 = vpop.permute.xlu0 %856
    %v858 = vlaneseq
    %v859 = vshrl.u32 %v858, 7
    %v860 = vsub.s32 0, %v859
    %v861 = vrot.slane %v845, %v860
    %vm862 = vcmp.eq.s32.totalorder %v848, %v861
    %vm863 = vcmp.eq.s32.totalorder %v851, %v861
    %vm864 = vcmp.eq.s32.totalorder %v854, %v861
    %vm865 = vcmp.eq.s32.totalorder %v857, %v861
    %vm866 = vcmp.le.f32.partialorder %v837, 0.25
    %vm867 = vcmp.le.f32.partialorder %v838, 0.25
    %vm868 = vcmp.le.f32.partialorder %v839, 0.25
    %vm869 = vcmp.le.f32.partialorder %v840, 0.25
    %vm870 = vmand %vm862, %vm866
    %vm871 = vmand %vm863, %vm867
    %vm872 = vmand %vm864, %vm868
    %vm873 = vmand %vm865, %vm869
    %v874 = vsel %vm870, 1, 0
    %v875 = vsel %vm871, 1, 0
    %v876 = vsel %vm872, 1, 0
    %v877 = vsel %vm873, 1, 0
    %v878 = vcvt.s32.f32 %v874
    %v879 = vcvt.s32.f32 %v875
    %v880 = vcvt.s32.f32 %v876
    %v881 = vcvt.s32.f32 %v877
    %vm886 = vcmask 1040384
    %v887 = vrot.slane %v878, 7
    %v888 = vrot.slane %v879, 7
    %v889 = vsel %vm886, %v887, %v888
    %v890 = vrot.slane %v880, 7
    %v891 = vsel %vm886, %v888, %v890
    %v892 = vrot.slane %v881, 7
    %v893 = vsel %vm886, %v890, %v892
    %v898 = vsel %vm886, 0.0, %v887
    %v899 = vadd.f32 %v878, %v898
    %v900 = vadd.f32 %v879, %v889
    %v901 = vadd.f32 %v880, %v891
    %v902 = vadd.f32 %v881, %v893
    %vm907 = vcmask 1041408
    %v908 = vrot.slane %v899, 6
    %v909 = vrot.slane %v900, 6
    %v910 = vsel %vm907, %v908, %v909
    %v911 = vrot.slane %v901, 6
    %v912 = vsel %vm907, %v909, %v911
    %v913 = vrot.slane %v902, 6
    %v914 = vsel %vm907, %v911, %v913
    %v919 = vsel %vm907, 0.0, %v908
    %v920 = vadd.f32 %v899, %v919
    %v921 = vadd.f32 %v900, %v910
    %v922 = vadd.f32 %v901, %v912
    %v923 = vadd.f32 %v902, %v914
    %v928 = vrot.slane %v920, 4
    %v929 = vrot.slane %v921, 4
    %v930 = vsel %vm73, %v928, %v929
    %v931 = vrot.slane %v922, 4
    %v932 = vsel %vm73, %v929, %v931
    %v933 = vrot.slane %v923, 4
    %v934 = vsel %vm73, %v931, %v933
    %v939 = vsel %vm73, 0.0, %v928
    %v940 = vadd.f32 %v920, %v939
    %v941 = vadd.f32 %v921, %v930
    %v942 = vadd.f32 %v922, %v932
    %v943 = vadd.f32 %v923, %v934
    %v944 = vadd.f32 %v940, 0.0
    %v945 = vadd.f32 %v941, %v940
    %v946 = vadd.f32 %v942, %v941
    %v947 = vadd.f32 %v943, %v942
    %v948 = vadd.f32 %v944, 0.0
    %v949 = vadd.f32 %v945, 0.0
    %v950 = vadd.f32 %v946, %v944
    %v951 = vadd.f32 %v947, %v945
    %vm952 = vcmp.le.f32.partialorder %v948, 16.0
    %vm953 = vcmp.le.f32.partialorder %v949, 16.0
    %vm954 = vcmp.le.f32.partialorder %v950, 16.0
    %vm955 = vcmp.le.f32.partialorder %v951, 16.0
    %vm956 = vmand %vm870, %vm952
    %vm957 = vmand %vm871, %vm953
    %vm958 = vmand %vm872, %vm954
    %vm959 = vmand %vm873, %vm955
    %v960 = vlaneseq
    %v961 = vshrl.u32 %v960, 7
    %v962 = vadd.s32 %v961, 8
    %v963 = vadd.s32 %v961, 16
    %v964 = vadd.s32 %v961, 24
    %s965 = smul.u32 0, 16
    %v966 = vlaneseq
    %v967 = vand.u32 %v966, 127
    %v968 = vstv %s965
    %v969 = vadd.s32 %v968, %v967
    %vm970 = vcmp.eq.s32.totalorder %v961, %v969
    %vm971 = vcmp.eq.s32.totalorder %v962, %v969
    %vm972 = vcmp.eq.s32.totalorder %v963, %v969
    %vm973 = vcmp.eq.s32.totalorder %v964, %v969
    %vm974 = vmor %vm956, %vm970
    %vm975 = vmor %vm957, %vm971
    %vm976 = vmor %vm958, %vm972
    %vm977 = vmor %vm959, %vm973
    %v978 = vsel %vm974, 0.0, -1e+30
    %v979 = vsel %vm975, 0.0, -1e+30
    %v980 = vsel %vm976, 0.0, -1e+30
    %v981 = vsel %vm977, 0.0, -1e+30
    %v982 = vld [vmem:[%s9] sm:$0xf]
    %v983 = vld [vmem:[%s9 + $0x4] sm:$0xf]
    %v984 = vld [vmem:[%s9 + $0x8] sm:$0xf]
    %v985 = vld [vmem:[%s9 + $0xc] sm:$0xf]
    %v986 = vld [vmem:[%s9 + $0x10] sm:$0xf]
    %v987 = vld [vmem:[%s9 + $0x14] sm:$0xf]
    %v988 = vld [vmem:[%s9 + $0x18] sm:$0xf]
    %v989 = vld [vmem:[%s9 + $0x1c] sm:$0xf]
    %v990 = vld [vmem:[%s9 + $0x20] sm:$0xf]
    %v991 = vld [vmem:[%s9 + $0x24] sm:$0xf]
    %v992 = vld [vmem:[%s9 + $0x28] sm:$0xf]
    %v993 = vld [vmem:[%s9 + $0x2c] sm:$0xf]
    %v994 = vld [vmem:[%s9 + $0x30] sm:$0xf]
    %v995 = vld [vmem:[%s9 + $0x34] sm:$0xf]
    %v996 = vld [vmem:[%s9 + $0x38] sm:$0xf]
    %v997 = vld [vmem:[%s9 + $0x3c] sm:$0xf]
    %v998 = vld [vmem:[%s10] sm:$0x3]
    %v999 = vlaneseq
    %v1000 = vshrl.u32 %v999, 7
    %v1001 = vsub.s32 0, %v1000
    %v1002 = vrot.slane %v205, %v1001
    %v1003 = vsub.f32 %v114, %v1002
    %v1004 = vsub.f32 %v117, %v1002
    %v1005 = vsub.f32 %v122, %v1002
    %v1006 = vsub.f32 %v125, %v1002
    %v1007 = vmax.f32 %v1003, 0.0
    %v1008 = vmax.f32 %v1004, 0.0
    %v1009 = vmax.f32 %v1005, 0.0
    %v1010 = vmax.f32 %v1006, 0.0
    %v1011 = vpack.c.bf16 %v1008, %v1007
    %v1012 = vpack.c.bf16 %v1010, %v1009
    %v1013 = vpack.c.bf16 %v979, %v978
    %v1014 = vpack.c.bf16 %v981, %v980
    %vm1015 = vcmask 31744
    %v1017 = vsel %vm1015, %v1013, 0
    %v1020 = vsel %vm1015, %v1014, 0
    %v1023 = vsel %vm907, %v998, 0
    %1025 = vmatprep.subr.bf16.mxu0 0
    %1026 = vmatpush1.bf16.msra.mxu0 %v1023
    %1027 = vmatprep.subr.bf16.mxu0 0
    %1028 = vmatpush1.bf16.msra.mxu0 0
    %1029 = vmatprep.subr.bf16.mxu0 0
    %1030 = vmatpush1.bf16.msra.mxu0 0
    %1031 = vmatprep.subr.bf16.mxu0 0
    %1032 = vmatpush1.bf16.msra.mxu0 0
    %1033 = vmatprep.subr.bf16.mxu0 0
    %1034 = vmatpush1.bf16.msra.mxu0 0
    %1035 = vmatprep.subr.bf16.mxu0 0
    %1036 = vmatpush1.bf16.msra.mxu0 0
    %1037 = vmatprep.subr.bf16.mxu0 0
    %1038 = vmatpush1.bf16.msra.mxu0 0
    %1039 = vmatprep.subr.bf16.mxu0 0
    %1040 = vmatpush1.bf16.msra.mxu0 0
    %1041 = vmatprep.subr.bf16.mxu0 0
    %1042 = vmatpush1.bf16.msra.mxu0 0
    %1043 = vmatprep.subr.bf16.mxu0 0
    %1044 = vmatpush1.bf16.msra.mxu0 0
    %1045 = vmatprep.subr.bf16.mxu0 0
    %1046 = vmatpush1.bf16.msra.mxu0 0
    %1047 = vmatprep.subr.bf16.mxu0 0
    %1048 = vmatpush1.bf16.msra.mxu0 0
    %1049 = vmatprep.subr.bf16.mxu0 0
    %1050 = vmatpush1.bf16.msra.mxu0 0
    %1051 = vmatprep.subr.bf16.mxu0 0
    %1052 = vmatpush1.bf16.msra.mxu0 0
    %1053 = vmatprep.subr.bf16.mxu0 0
    %1054 = vmatpush1.bf16.msra.mxu0 0
    %1055 = vmatprep.subr.bf16.mxu0 0
    %1056 = vmatpush1.bf16.msra.mxu0 0
    %1057 = vmatprep.mubr.bf16.mxu0 0
    %1058 = vmatmul.mubr.bf16.gmra.mrb[0].mxu0 %v1017
    %v1059 = vpop.f32.mrb[0].mxu0
    %v1060 = vadd.f32 0.0, %v1059
    %v1061 = vpop.f32.mrb[0].mxu0
    %v1062 = vpop.f32.mrb[0].mxu0
    %v1063 = vadd.f32 0.0, %v1062
    %v1064 = vpop.f32.mrb[0].mxu0
    %1065 = vmatprep.mubr.bf16.mxu0 0
    %1066 = vmatmul.mubr.bf16.gmra.mrb[0].mxu0 %v1020
    %v1067 = vpop.f32.mrb[0].mxu0
    %v1068 = vadd.f32 0.0, %v1067
    %v1069 = vpop.f32.mrb[0].mxu0
    %v1070 = vpop.f32.mrb[0].mxu0
    %v1071 = vadd.f32 0.0, %v1070
    %v1072 = vpop.f32.mrb[0].mxu0
    %1073 = vdwg.mxu0
    %v1090 = vunpack.c.l.b16 %v982
    %v1091 = vunpack.c.l.b16 %v983
    %v1092 = vunpack.c.l.b16 %v984
    %v1093 = vunpack.c.l.b16 %v985
    %v1094 = vunpack.c.l.b16 %v986
    %v1095 = vunpack.c.l.b16 %v987
    %v1096 = vunpack.c.l.b16 %v988
    %v1097 = vunpack.c.l.b16 %v989
    %v1098 = vunpack.c.l.b16 %v990
    %v1099 = vunpack.c.l.b16 %v991
    %v1100 = vunpack.c.l.b16 %v992
    %v1101 = vunpack.c.l.b16 %v993
    %v1102 = vunpack.c.l.b16 %v994
    %v1103 = vunpack.c.l.b16 %v995
    %v1104 = vunpack.c.l.b16 %v996
    %v1105 = vunpack.c.l.b16 %v997
    %v1106 = vpack.c.b16 %v1091, %v1090
    %v1107 = vpack.c.b16 %v1093, %v1092
    %v1108 = vpack.c.b16 %v1095, %v1094
    %v1109 = vpack.c.b16 %v1097, %v1096
    %v1110 = vpack.c.b16 %v1099, %v1098
    %v1111 = vpack.c.b16 %v1101, %v1100
    %v1112 = vpack.c.b16 %v1103, %v1102
    %v1113 = vpack.c.b16 %v1105, %v1104
    %1122 = vmatprep.subr.bf16.mxu0 0
    %1123 = vmatpush1.bf16.msra.mxu0 %v1106
    %1124 = vmatprep.subr.bf16.mxu0 0
    %1125 = vmatpush1.bf16.msra.mxu0 %v1107
    %1126 = vmatprep.subr.bf16.mxu0 0
    %1127 = vmatpush1.bf16.msra.mxu0 %v1108
    %1128 = vmatprep.subr.bf16.mxu0 0
    %1129 = vmatpush1.bf16.msra.mxu0 %v1109
    %1130 = vmatprep.subr.bf16.mxu0 0
    %1131 = vmatpush1.bf16.msra.mxu0 %v1110
    %1132 = vmatprep.subr.bf16.mxu0 0
    %1133 = vmatpush1.bf16.msra.mxu0 %v1111
    %1134 = vmatprep.subr.bf16.mxu0 0
    %1135 = vmatpush1.bf16.msra.mxu0 %v1112
    %1136 = vmatprep.subr.bf16.mxu0 0
    %1137 = vmatpush1.bf16.msra.mxu0 %v1113
    %1138 = vmatprep.subr.bf16.mxu0 0
    %1139 = vmatpush1.bf16.msra.mxu0 0
    %1140 = vmatprep.subr.bf16.mxu0 0
    %1141 = vmatpush1.bf16.msra.mxu0 0
    %1142 = vmatprep.subr.bf16.mxu0 0
    %1143 = vmatpush1.bf16.msra.mxu0 0
    %1144 = vmatprep.subr.bf16.mxu0 0
    %1145 = vmatpush1.bf16.msra.mxu0 0
    %1146 = vmatprep.subr.bf16.mxu0 0
    %1147 = vmatpush1.bf16.msra.mxu0 0
    %1148 = vmatprep.subr.bf16.mxu0 0
    %1149 = vmatpush1.bf16.msra.mxu0 0
    %1150 = vmatprep.subr.bf16.mxu0 0
    %1151 = vmatpush1.bf16.msra.mxu0 0
    %1152 = vmatprep.subr.bf16.mxu0 0
    %1153 = vmatpush1.bf16.msra.mxu0 0
    %1154 = vmatprep.mubr.bf16.mxu0 0
    %1155 = vmatmul.mubr.bf16.gmra.mrb[0].mxu0 %v1011
    %v1156 = vpop.f32.mrb[0].mxu0
    %v1157 = vadd.f32 %v1060, %v1156
    %v1158 = vpop.f32.mrb[0].mxu0
    %v1159 = vpop.f32.mrb[0].mxu0
    %v1160 = vadd.f32 %v1063, %v1159
    %v1161 = vpop.f32.mrb[0].mxu0
    %1162 = vmatprep.mubr.bf16.mxu0 0
    %1163 = vmatmul.mubr.bf16.gmra.mrb[0].mxu0 %v1012
    %v1164 = vpop.f32.mrb[0].mxu0
    %v1165 = vadd.f32 %v1068, %v1164
    %v1166 = vpop.f32.mrb[0].mxu0
    %v1167 = vpop.f32.mrb[0].mxu0
    %v1168 = vadd.f32 %v1071, %v1167
    %v1169 = vpop.f32.mrb[0].mxu0
    %1170 = vdwg.mxu0
    %v1171 = vmax.f32 %v1157, %v1160
    %v1172 = vmax.f32 %v1165, %v1168
    %v1173 = vmax.f32 %v1171, %v1172
    %v1174 = vrot.slane %v1173, 4
    %v1175 = vmax.f32 %v1173, %v1174
    %v1176 = vrot.slane %v1175, 2
    %v1177 = vmax.f32 %v1175, %v1176
    %v1178 = vrot.slane %v1177, 1
    %v1179 = vmax.f32 %v1177, %v1178
    %v1180 = vlaneseq
    %v1181 = vshrl.u32 %v1180, 7
    %v1182 = vsub.s32 1, %v1181
    %v1183 = vrot.slane %v205, %v1182
    %v1184 = vsub.f32 %v114, %v1183
    %v1185 = vsub.f32 %v117, %v1183
    %v1186 = vsub.f32 %v122, %v1183
    %v1187 = vsub.f32 %v125, %v1183
    %v1188 = vmax.f32 %v1184, 0.0
    %v1189 = vmax.f32 %v1185, 0.0
    %v1190 = vmax.f32 %v1186, 0.0
    %v1191 = vmax.f32 %v1187, 0.0
    %v1192 = vpack.c.bf16 %v1189, %v1188
    %v1193 = vpack.c.bf16 %v1191, %v1190
    %1196 = vrot.lane.b32.xlu0 %v1013, 124
    %v1197 = vpop.permute.xlu0 %1196
    %1198 = vrot.lane.b32.xlu0 %v1014, 124
    %v1199 = vpop.permute.xlu0 %1198
    %v1201 = vsel %vm1015, %v1197, 0
    %v1204 = vsel %vm1015, %v1199, 0
    %1206 = vmatprep.subr.bf16.mxu0 0
    %1207 = vmatpush1.bf16.msra.mxu0 %v1023
    %1208 = vmatprep.subr.bf16.mxu0 0
    %1209 = vmatpush1.bf16.msra.mxu0 0
    %1210 = vmatprep.subr.bf16.mxu0 0
    %1211 = vmatpush1.bf16.msra.mxu0 0
    %1212 = vmatprep.subr.bf16.mxu0 0
    %1213 = vmatpush1.bf16.msra.mxu0 0
    %1214 = vmatprep.subr.bf16.mxu0 0
    %1215 = vmatpush1.bf16.msra.mxu0 0
    %1216 = vmatprep.subr.bf16.mxu0 0
    %1217 = vmatpush1.bf16.msra.mxu0 0
    %1218 = vmatprep.subr.bf16.mxu0 0
    %1219 = vmatpush1.bf16.msra.mxu0 0
    %1220 = vmatprep.subr.bf16.mxu0 0
    %1221 = vmatpush1.bf16.msra.mxu0 0
    %1222 = vmatprep.subr.bf16.mxu0 0
    %1223 = vmatpush1.bf16.msra.mxu0 0
    %1224 = vmatprep.subr.bf16.mxu0 0
    %1225 = vmatpush1.bf16.msra.mxu0 0
    %1226 = vmatprep.subr.bf16.mxu0 0
    %1227 = vmatpush1.bf16.msra.mxu0 0
    %1228 = vmatprep.subr.bf16.mxu0 0
    %1229 = vmatpush1.bf16.msra.mxu0 0
    %1230 = vmatprep.subr.bf16.mxu0 0
    %1231 = vmatpush1.bf16.msra.mxu0 0
    %1232 = vmatprep.subr.bf16.mxu0 0
    %1233 = vmatpush1.bf16.msra.mxu0 0
    %1234 = vmatprep.subr.bf16.mxu0 0
    %1235 = vmatpush1.bf16.msra.mxu0 0
    %1236 = vmatprep.subr.bf16.mxu0 0
    %1237 = vmatpush1.bf16.msra.mxu0 0
    %1238 = vmatprep.mubr.bf16.mxu0 0
    %1239 = vmatmul.mubr.bf16.gmra.mrb[0].mxu0 %v1201
    %v1240 = vpop.f32.mrb[0].mxu0
    %v1241 = vadd.f32 0.0, %v1240
    %v1242 = vpop.f32.mrb[0].mxu0
    %v1243 = vpop.f32.mrb[0].mxu0
    %v1244 = vadd.f32 0.0, %v1243
    %v1245 = vpop.f32.mrb[0].mxu0
    %1246 = vmatprep.mubr.bf16.mxu0 0
    %1247 = vmatmul.mubr.bf16.gmra.mrb[0].mxu0 %v1204
    %v1248 = vpop.f32.mrb[0].mxu0
    %v1249 = vadd.f32 0.0, %v1248
    %v1250 = vpop.f32.mrb[0].mxu0
    %v1251 = vpop.f32.mrb[0].mxu0
    %v1252 = vadd.f32 0.0, %v1251
    %v1253 = vpop.f32.mrb[0].mxu0
    %1254 = vdwg.mxu0
    %1255 = vmatprep.subr.bf16.mxu0 0
    %1256 = vmatpush1.bf16.msra.mxu0 %v1106
    %1257 = vmatprep.subr.bf16.mxu0 0
    %1258 = vmatpush1.bf16.msra.mxu0 %v1107
    %1259 = vmatprep.subr.bf16.mxu0 0
    %1260 = vmatpush1.bf16.msra.mxu0 %v1108
    %1261 = vmatprep.subr.bf16.mxu0 0
    %1262 = vmatpush1.bf16.msra.mxu0 %v1109
    %1263 = vmatprep.subr.bf16.mxu0 0
    %1264 = vmatpush1.bf16.msra.mxu0 %v1110
    %1265 = vmatprep.subr.bf16.mxu0 0
    %1266 = vmatpush1.bf16.msra.mxu0 %v1111
    %1267 = vmatprep.subr.bf16.mxu0 0
    %1268 = vmatpush1.bf16.msra.mxu0 %v1112
    %1269 = vmatprep.subr.bf16.mxu0 0
    %1270 = vmatpush1.bf16.msra.mxu0 %v1113
    %1271 = vmatprep.subr.bf16.mxu0 0
    %1272 = vmatpush1.bf16.msra.mxu0 0
    %1273 = vmatprep.subr.bf16.mxu0 0
    %1274 = vmatpush1.bf16.msra.mxu0 0
    %1275 = vmatprep.subr.bf16.mxu0 0
    %1276 = vmatpush1.bf16.msra.mxu0 0
    %1277 = vmatprep.subr.bf16.mxu0 0
    %1278 = vmatpush1.bf16.msra.mxu0 0
    %1279 = vmatprep.subr.bf16.mxu0 0
    %1280 = vmatpush1.bf16.msra.mxu0 0
    %1281 = vmatprep.subr.bf16.mxu0 0
    %1282 = vmatpush1.bf16.msra.mxu0 0
    %1283 = vmatprep.subr.bf16.mxu0 0
    %1284 = vmatpush1.bf16.msra.mxu0 0
    %1285 = vmatprep.subr.bf16.mxu0 0
    %1286 = vmatpush1.bf16.msra.mxu0 0
    %1287 = vmatprep.mubr.bf16.mxu0 0
    %1288 = vmatmul.mubr.bf16.gmra.mrb[0].mxu0 %v1192
    %v1289 = vpop.f32.mrb[0].mxu0
    %v1290 = vadd.f32 %v1241, %v1289
    %v1291 = vpop.f32.mrb[0].mxu0
    %v1292 = vpop.f32.mrb[0].mxu0
    %v1293 = vadd.f32 %v1244, %v1292
    %v1294 = vpop.f32.mrb[0].mxu0
    %1295 = vmatprep.mubr.bf16.mxu0 0
    %1296 = vmatmul.mubr.bf16.gmra.mrb[0].mxu0 %v1193
    %v1297 = vpop.f32.mrb[0].mxu0
    %v1298 = vadd.f32 %v1249, %v1297
    %v1299 = vpop.f32.mrb[0].mxu0
    %v1300 = vpop.f32.mrb[0].mxu0
    %v1301 = vadd.f32 %v1252, %v1300
    %v1302 = vpop.f32.mrb[0].mxu0
    %1303 = vdwg.mxu0
    %v1304 = vmax.f32 %v1290, %v1293
    %v1305 = vmax.f32 %v1298, %v1301
    %v1306 = vmax.f32 %v1304, %v1305
    %v1307 = vrot.slane %v1306, 4
    %v1308 = vmax.f32 %v1306, %v1307
    %v1309 = vrot.slane %v1308, 2
    %v1310 = vmax.f32 %v1308, %v1309
    %v1311 = vrot.slane %v1310, 1
    %v1312 = vmax.f32 %v1310, %v1311
    %v1313 = vlaneseq
    %v1314 = vshrl.u32 %v1313, 7
    %v1315 = vsub.s32 2, %v1314
    %v1316 = vrot.slane %v205, %v1315
    %v1317 = vsub.f32 %v114, %v1316
    %v1318 = vsub.f32 %v117, %v1316
    %v1319 = vsub.f32 %v122, %v1316
    %v1320 = vsub.f32 %v125, %v1316
    %v1321 = vmax.f32 %v1317, 0.0
    %v1322 = vmax.f32 %v1318, 0.0
    %v1323 = vmax.f32 %v1319, 0.0
    %v1324 = vmax.f32 %v1320, 0.0
    %v1325 = vpack.c.bf16 %v1322, %v1321
    %v1326 = vpack.c.bf16 %v1324, %v1323
    %1327 = vrot.lane.b32.xlu0 %v1013, 120
    %v1328 = vpop.permute.xlu0 %1327
    %1329 = vrot.lane.b32.xlu0 %v1014, 120
    %v1330 = vpop.permute.xlu0 %1329
    %v1332 = vsel %vm1015, %v1328, 0
    %v1335 = vsel %vm1015, %v1330, 0
    %1337 = vmatprep.subr.bf16.mxu0 0
    %1338 = vmatpush1.bf16.msra.mxu0 %v1023
    %1339 = vmatprep.subr.bf16.mxu0 0
    %1340 = vmatpush1.bf16.msra.mxu0 0
    %1341 = vmatprep.subr.bf16.mxu0 0
    %1342 = vmatpush1.bf16.msra.mxu0 0
    %1343 = vmatprep.subr.bf16.mxu0 0
    %1344 = vmatpush1.bf16.msra.mxu0 0
    %1345 = vmatprep.subr.bf16.mxu0 0
    %1346 = vmatpush1.bf16.msra.mxu0 0
    %1347 = vmatprep.subr.bf16.mxu0 0
    %1348 = vmatpush1.bf16.msra.mxu0 0
    %1349 = vmatprep.subr.bf16.mxu0 0
    %1350 = vmatpush1.bf16.msra.mxu0 0
    %1351 = vmatprep.subr.bf16.mxu0 0
    %1352 = vmatpush1.bf16.msra.mxu0 0
    %1353 = vmatprep.subr.bf16.mxu0 0
    %1354 = vmatpush1.bf16.msra.mxu0 0
    %1355 = vmatprep.subr.bf16.mxu0 0
    %1356 = vmatpush1.bf16.msra.mxu0 0
    %1357 = vmatprep.subr.bf16.mxu0 0
    %1358 = vmatpush1.bf16.msra.mxu0 0
    %1359 = vmatprep.subr.bf16.mxu0 0
    %1360 = vmatpush1.bf16.msra.mxu0 0
    %1361 = vmatprep.subr.bf16.mxu0 0
    %1362 = vmatpush1.bf16.msra.mxu0 0
    %1363 = vmatprep.subr.bf16.mxu0 0
    %1364 = vmatpush1.bf16.msra.mxu0 0
    %1365 = vmatprep.subr.bf16.mxu0 0
    %1366 = vmatpush1.bf16.msra.mxu0 0
    %1367 = vmatprep.subr.bf16.mxu0 0
    %1368 = vmatpush1.bf16.msra.mxu0 0
    %1369 = vmatprep.mubr.bf16.mxu0 0
    %1370 = vmatmul.mubr.bf16.gmra.mrb[0].mxu0 %v1332
    %v1371 = vpop.f32.mrb[0].mxu0
    %v1372 = vadd.f32 0.0, %v1371
    %v1373 = vpop.f32.mrb[0].mxu0
    %v1374 = vpop.f32.mrb[0].mxu0
    %v1375 = vadd.f32 0.0, %v1374
    %v1376 = vpop.f32.mrb[0].mxu0
    %1377 = vmatprep.mubr.bf16.mxu0 0
    %1378 = vmatmul.mubr.bf16.gmra.mrb[0].mxu0 %v1335
    %v1379 = vpop.f32.mrb[0].mxu0
    %v1380 = vadd.f32 0.0, %v1379
    %v1381 = vpop.f32.mrb[0].mxu0
    %v1382 = vpop.f32.mrb[0].mxu0
    %v1383 = vadd.f32 0.0, %v1382
    %v1384 = vpop.f32.mrb[0].mxu0
    %1385 = vdwg.mxu0
    %1386 = vmatprep.subr.bf16.mxu0 0
    %1387 = vmatpush1.bf16.msra.mxu0 %v1106
    %1388 = vmatprep.subr.bf16.mxu0 0
    %1389 = vmatpush1.bf16.msra.mxu0 %v1107
    %1390 = vmatprep.subr.bf16.mxu0 0
    %1391 = vmatpush1.bf16.msra.mxu0 %v1108
    %1392 = vmatprep.subr.bf16.mxu0 0
    %1393 = vmatpush1.bf16.msra.mxu0 %v1109
    %1394 = vmatprep.subr.bf16.mxu0 0
    %1395 = vmatpush1.bf16.msra.mxu0 %v1110
    %1396 = vmatprep.subr.bf16.mxu0 0
    %1397 = vmatpush1.bf16.msra.mxu0 %v1111
    %1398 = vmatprep.subr.bf16.mxu0 0
    %1399 = vmatpush1.bf16.msra.mxu0 %v1112
    %1400 = vmatprep.subr.bf16.mxu0 0
    %1401 = vmatpush1.bf16.msra.mxu0 %v1113
    %1402 = vmatprep.subr.bf16.mxu0 0
    %1403 = vmatpush1.bf16.msra.mxu0 0
    %1404 = vmatprep.subr.bf16.mxu0 0
    %1405 = vmatpush1.bf16.msra.mxu0 0
    %1406 = vmatprep.subr.bf16.mxu0 0
    %1407 = vmatpush1.bf16.msra.mxu0 0
    %1408 = vmatprep.subr.bf16.mxu0 0
    %1409 = vmatpush1.bf16.msra.mxu0 0
    %1410 = vmatprep.subr.bf16.mxu0 0
    %1411 = vmatpush1.bf16.msra.mxu0 0
    %1412 = vmatprep.subr.bf16.mxu0 0
    %1413 = vmatpush1.bf16.msra.mxu0 0
    %1414 = vmatprep.subr.bf16.mxu0 0
    %1415 = vmatpush1.bf16.msra.mxu0 0
    %1416 = vmatprep.subr.bf16.mxu0 0
    %1417 = vmatpush1.bf16.msra.mxu0 0
    %1418 = vmatprep.mubr.bf16.mxu0 0
    %1419 = vmatmul.mubr.bf16.gmra.mrb[0].mxu0 %v1325
    %v1420 = vpop.f32.mrb[0].mxu0
    %v1421 = vadd.f32 %v1372, %v1420
    %v1422 = vpop.f32.mrb[0].mxu0
    %v1423 = vpop.f32.mrb[0].mxu0
    %v1424 = vadd.f32 %v1375, %v1423
    %v1425 = vpop.f32.mrb[0].mxu0
    %1426 = vmatprep.mubr.bf16.mxu0 0
    %1427 = vmatmul.mubr.bf16.gmra.mrb[0].mxu0 %v1326
    %v1428 = vpop.f32.mrb[0].mxu0
    %v1429 = vadd.f32 %v1380, %v1428
    %v1430 = vpop.f32.mrb[0].mxu0
    %v1431 = vpop.f32.mrb[0].mxu0
    %v1432 = vadd.f32 %v1383, %v1431
    %v1433 = vpop.f32.mrb[0].mxu0
    %1434 = vdwg.mxu0
    %v1435 = vmax.f32 %v1421, %v1424
    %v1436 = vmax.f32 %v1429, %v1432
    %v1437 = vmax.f32 %v1435, %v1436
    %v1438 = vrot.slane %v1437, 4
    %v1439 = vmax.f32 %v1437, %v1438
    %v1440 = vrot.slane %v1439, 2
    %v1441 = vmax.f32 %v1439, %v1440
    %v1442 = vrot.slane %v1441, 1
    %v1443 = vmax.f32 %v1441, %v1442
    %v1444 = vlaneseq
    %v1445 = vshrl.u32 %v1444, 7
    %v1446 = vsub.s32 3, %v1445
    %v1447 = vrot.slane %v205, %v1446
    %v1448 = vsub.f32 %v114, %v1447
    %v1449 = vsub.f32 %v117, %v1447
    %v1450 = vsub.f32 %v122, %v1447
    %v1451 = vsub.f32 %v125, %v1447
    %v1452 = vmax.f32 %v1448, 0.0
    %v1453 = vmax.f32 %v1449, 0.0
    %v1454 = vmax.f32 %v1450, 0.0
    %v1455 = vmax.f32 %v1451, 0.0
    %v1456 = vpack.c.bf16 %v1453, %v1452
    %v1457 = vpack.c.bf16 %v1455, %v1454
    %1458 = vrot.lane.b32.xlu0 %v1013, 116
    %v1459 = vpop.permute.xlu0 %1458
    %1460 = vrot.lane.b32.xlu0 %v1014, 116
    %v1461 = vpop.permute.xlu0 %1460
    %v1463 = vsel %vm1015, %v1459, 0
    %v1466 = vsel %vm1015, %v1461, 0
    %1468 = vmatprep.subr.bf16.mxu0 0
    %1469 = vmatpush1.bf16.msra.mxu0 %v1023
    %1470 = vmatprep.subr.bf16.mxu0 0
    %1471 = vmatpush1.bf16.msra.mxu0 0
    %1472 = vmatprep.subr.bf16.mxu0 0
    %1473 = vmatpush1.bf16.msra.mxu0 0
    %1474 = vmatprep.subr.bf16.mxu0 0
    %1475 = vmatpush1.bf16.msra.mxu0 0
    %1476 = vmatprep.subr.bf16.mxu0 0
    %1477 = vmatpush1.bf16.msra.mxu0 0
    %1478 = vmatprep.subr.bf16.mxu0 0
    %1479 = vmatpush1.bf16.msra.mxu0 0
    %1480 = vmatprep.subr.bf16.mxu0 0
    %1481 = vmatpush1.bf16.msra.mxu0 0
    %1482 = vmatprep.subr.bf16.mxu0 0
    %1483 = vmatpush1.bf16.msra.mxu0 0
    %1484 = vmatprep.subr.bf16.mxu0 0
    %1485 = vmatpush1.bf16.msra.mxu0 0
    %1486 = vmatprep.subr.bf16.mxu0 0
    %1487 = vmatpush1.bf16.msra.mxu0 0
    %1488 = vmatprep.subr.bf16.mxu0 0
    %1489 = vmatpush1.bf16.msra.mxu0 0
    %1490 = vmatprep.subr.bf16.mxu0 0
    %1491 = vmatpush1.bf16.msra.mxu0 0
    %1492 = vmatprep.subr.bf16.mxu0 0
    %1493 = vmatpush1.bf16.msra.mxu0 0
    %1494 = vmatprep.subr.bf16.mxu0 0
    %1495 = vmatpush1.bf16.msra.mxu0 0
    %1496 = vmatprep.subr.bf16.mxu0 0
    %1497 = vmatpush1.bf16.msra.mxu0 0
    %1498 = vmatprep.subr.bf16.mxu0 0
    %1499 = vmatpush1.bf16.msra.mxu0 0
    %1500 = vmatprep.mubr.bf16.mxu0 0
    %1501 = vmatmul.mubr.bf16.gmra.mrb[0].mxu0 %v1463
    %v1502 = vpop.f32.mrb[0].mxu0
    %v1503 = vadd.f32 0.0, %v1502
    %v1504 = vpop.f32.mrb[0].mxu0
    %v1505 = vpop.f32.mrb[0].mxu0
    %v1506 = vadd.f32 0.0, %v1505
    %v1507 = vpop.f32.mrb[0].mxu0
    %1508 = vmatprep.mubr.bf16.mxu0 0
    %1509 = vmatmul.mubr.bf16.gmra.mrb[0].mxu0 %v1466
    %v1510 = vpop.f32.mrb[0].mxu0
    %v1511 = vadd.f32 0.0, %v1510
    %v1512 = vpop.f32.mrb[0].mxu0
    %v1513 = vpop.f32.mrb[0].mxu0
    %v1514 = vadd.f32 0.0, %v1513
    %v1515 = vpop.f32.mrb[0].mxu0
    %1516 = vdwg.mxu0
    %1517 = vmatprep.subr.bf16.mxu0 0
    %1518 = vmatpush1.bf16.msra.mxu0 %v1106
    %1519 = vmatprep.subr.bf16.mxu0 0
    %1520 = vmatpush1.bf16.msra.mxu0 %v1107
    %1521 = vmatprep.subr.bf16.mxu0 0
    %1522 = vmatpush1.bf16.msra.mxu0 %v1108
    %1523 = vmatprep.subr.bf16.mxu0 0
    %1524 = vmatpush1.bf16.msra.mxu0 %v1109
    %1525 = vmatprep.subr.bf16.mxu0 0
    %1526 = vmatpush1.bf16.msra.mxu0 %v1110
    %1527 = vmatprep.subr.bf16.mxu0 0
    %1528 = vmatpush1.bf16.msra.mxu0 %v1111
    %1529 = vmatprep.subr.bf16.mxu0 0
    %1530 = vmatpush1.bf16.msra.mxu0 %v1112
    %1531 = vmatprep.subr.bf16.mxu0 0
    %1532 = vmatpush1.bf16.msra.mxu0 %v1113
    %1533 = vmatprep.subr.bf16.mxu0 0
    %1534 = vmatpush1.bf16.msra.mxu0 0
    %1535 = vmatprep.subr.bf16.mxu0 0
    %1536 = vmatpush1.bf16.msra.mxu0 0
    %1537 = vmatprep.subr.bf16.mxu0 0
    %1538 = vmatpush1.bf16.msra.mxu0 0
    %1539 = vmatprep.subr.bf16.mxu0 0
    %1540 = vmatpush1.bf16.msra.mxu0 0
    %1541 = vmatprep.subr.bf16.mxu0 0
    %1542 = vmatpush1.bf16.msra.mxu0 0
    %1543 = vmatprep.subr.bf16.mxu0 0
    %1544 = vmatpush1.bf16.msra.mxu0 0
    %1545 = vmatprep.subr.bf16.mxu0 0
    %1546 = vmatpush1.bf16.msra.mxu0 0
    %1547 = vmatprep.subr.bf16.mxu0 0
    %1548 = vmatpush1.bf16.msra.mxu0 0
    %1549 = vmatprep.mubr.bf16.mxu0 0
    %1550 = vmatmul.mubr.bf16.gmra.mrb[0].mxu0 %v1456
    %v1551 = vpop.f32.mrb[0].mxu0
    %v1552 = vadd.f32 %v1503, %v1551
    %v1553 = vpop.f32.mrb[0].mxu0
    %v1554 = vpop.f32.mrb[0].mxu0
    %v1555 = vadd.f32 %v1506, %v1554
    %v1556 = vpop.f32.mrb[0].mxu0
    %1557 = vmatprep.mubr.bf16.mxu0 0
    %1558 = vmatmul.mubr.bf16.gmra.mrb[0].mxu0 %v1457
    %v1559 = vpop.f32.mrb[0].mxu0
    %v1560 = vadd.f32 %v1511, %v1559
    %v1561 = vpop.f32.mrb[0].mxu0
    %v1562 = vpop.f32.mrb[0].mxu0
    %v1563 = vadd.f32 %v1514, %v1562
    %v1564 = vpop.f32.mrb[0].mxu0
    %1565 = vdwg.mxu0
    %v1566 = vmax.f32 %v1552, %v1555
    %v1567 = vmax.f32 %v1560, %v1563
    %v1568 = vmax.f32 %v1566, %v1567
    %v1569 = vrot.slane %v1568, 4
    %v1570 = vmax.f32 %v1568, %v1569
    %v1571 = vrot.slane %v1570, 2
    %v1572 = vmax.f32 %v1570, %v1571
    %v1573 = vrot.slane %v1572, 1
    %v1574 = vmax.f32 %v1572, %v1573
    %v1575 = vsel %vm886, %v1179, %v1312
    %v1576 = vsel %vm907, %v1575, %v1443
    %v1577 = vsel %vm72, %v1576, %v1574
    %v1578 = vld [vmem:[%s11] sm:$0x1]
    %v1580 = vlaneseq
    %v1581 = vshrl.u32 %v1580, 7
    %v1582 = vsub.s32 0, %v1581
    %v1583 = vrot.slane %v1578, %v1582
    %v1585 = vadd.f32 %v1577, %v1583
    %1586 = vst [vmem:[#allocation2] sm:$0xf] %v1585
    // Predicated region
    $region50: #{tpu_custom_call.1} parent=1 // pred_check
      _
    $region51: #{tpu_custom_call.1} parent=1 // pred_check_branch
      %1588 = sbr.rel (0) target = $region53
    $region52: #{tpu_custom_call.1} parent=1 // pred_region
      %s1590 = ssub.s32 64, 64
      %1591 = vsyncadd [#allocation3], %s1590
      %s1593 = sshll.u32 [#allocation2], 4
      %s1594 = int_to_ptr.vmem [resolvable:$true] %s1593
      %1596 = dma.vmem_to_hbm [thread:$0]  %s1594, 64, %s12, [#allocation3]
    $region53: #{tpu_custom_call.1} parent=1 // pred_fallthru
      _
    // Predicated region
    $region54: #{tpu_custom_call.1} parent=1 // pred_check
      _
    $region55: #{tpu_custom_call.1} parent=1 // pred_check_branch
      %1598 = sbr.rel (0) target = $region57
    $region56: #{tpu_custom_call.1} parent=1 // pred_region
      %1599 = dma.done [#allocation3], 64
    $region57: #{tpu_custom_call.1} parent=1 // pred_fallthru
      _
    %1600 = vsyncpa [#allocation3], 1

</llo_original>
